<compile_context>
chip_gen: v6e
topology: v6e:2x2x1
jax: 0.10.0
libtpu: 0.0.40
codegen_flags: <defaults>
</compile_context>

<pallas_src>
import jax
import jax.numpy as jnp
from jax.experimental import pallas as pl
from jax.experimental.pallas import tpu as pltpu

A_DIM = 6
CONV_OUT_DIM = 128
FILTER_SIZE = 4
SCA_OUT_DIM = 128
S_LEN = 8
STRIDE = 1
L_TP = S_LEN - FILTER_SIZE + 1   # 5 conv output positions (throughput / downtime)
L_CS = A_DIM - FILTER_SIZE + 1   # 3 conv output positions (chunk sizes)
HIDDEN_DIM = 2 * CONV_OUT_DIM * L_TP + CONV_OUT_DIM * L_CS + 3 * SCA_OUT_DIM  # 2048

# Column offsets of the fused activation slab (== rows of the reordered hidden
# weight).  Concat order follows the PyTorch forward:
#   [chunkbitrate | buffersize | throughput | downtime | chunksize | chunkleft]
# with conv segments stored TIME-major so each conv output position is one
# aligned 128-wide store.
OFF_CB = 0
OFF_BS = OFF_CB + SCA_OUT_DIM
OFF_TP = OFF_BS + SCA_OUT_DIM
OFF_DT = OFF_TP + CONV_OUT_DIM * L_TP
OFF_CS = OFF_DT + CONV_OUT_DIM * L_TP
OFF_CL = OFF_CS + CONV_OUT_DIM * L_CS
assert OFF_CL + SCA_OUT_DIM == HIDDEN_DIM

# Flat-column indices into the [B, 6*S_LEN] input (row-major flatten of NCL).
COL_CB = 0 * S_LEN + (S_LEN - 1)   # last chunk bitrate      (row 0, last elem)
COL_BS = 1 * S_LEN + (S_LEN - 1)   # current buffer level    (row 1, last elem)
COL_TP = 2 * S_LEN                 # throughput history      (row 2, cols 0..7)
COL_DT = 3 * S_LEN                 # download-time history   (row 3, cols 0..7)
COL_CS = 4 * S_LEN                 # next chunk sizes        (row 4, cols 0..5)
COL_CL = 5 * S_LEN + (S_LEN - 1)   # chunks left             (row 5, last elem)


def actor_kernel(x_ref, wc_ref, bc_ref, ws_ref, bs_ref, wh_ref, bh_ref,
                 wo_ref, bo_ref, out_ref, acts_ref):
    f32 = jnp.float32
    Bp = x_ref.shape[0]
    x = x_ref[...]                                           # [Bp, 48]

    # ---- scalar branches: Linear(1 -> 128) + ReLU -> slab (VPU) ----
    def scalar_branch(col, j, off):
        s = x[:, col:col + 1]                                # [Bp, 1]
        w = ws_ref[j:j + 1, :]                               # [1, 128]
        b = bs_ref[j:j + 1, :]                               # [1, 128]
        acts_ref[:, off:off + SCA_OUT_DIM] = jnp.maximum(s * w + b, 0.0)

    scalar_branch(COL_CB, 0, OFF_CB)   # last chunk bitrate
    scalar_branch(COL_BS, 1, OFF_BS)   # buffer size
    scalar_branch(COL_CL, 2, OFF_CL)   # chunks left

    # ---- conv branches: Conv1d(1 -> 128, k=4) + ReLU on the VPU -> slab ----
    def conv_branch(col0, branch, n_pos, off):
        length = n_pos + FILTER_SIZE - 1
        # hoist each column broadcast once (re-used by up to 4 positions)
        cols = [jnp.broadcast_to(x[:, col0 + i:col0 + i + 1], (Bp, CONV_OUT_DIM))
                for i in range(length)]
        taps = [wc_ref[branch * FILTER_SIZE + k:branch * FILTER_SIZE + k + 1, :]
                for k in range(FILTER_SIZE)]                 # each [1, 128]
        b = bc_ref[branch:branch + 1, :]                     # [1, 128]
        for t in range(n_pos):
            acc = b + cols[t] * taps[0]
            for k in range(1, FILTER_SIZE):
                acc = acc + cols[t + k] * taps[k]
            lo = off + t * CONV_OUT_DIM
            acts_ref[:, lo:lo + CONV_OUT_DIM] = jnp.maximum(acc, 0.0)

    conv_branch(COL_TP, 0, L_TP, OFF_TP)   # throughput history
    conv_branch(COL_DT, 1, L_TP, OFF_DT)   # download-time history
    conv_branch(COL_CS, 2, L_CS, OFF_CS)   # next chunk sizes

    # ---- single fused hidden matmul, output layer, softmax ----
    hidden = jnp.dot(acts_ref[...], wh_ref[...], preferred_element_type=f32)
    hidden = jnp.maximum(hidden + bh_ref[...], 0.0)          # [Bp, 128]
    logits = jnp.dot(hidden, wo_ref[...], preferred_element_type=f32) + bo_ref[...]
    m = jnp.max(logits, axis=-1, keepdims=True)
    e = jnp.exp(logits - m)
    out_ref[...] = e / jnp.sum(e, axis=-1, keepdims=True)


def actor_forward(x, p):
    """x: [B, 6, S_LEN] float32 (NCL, same as the PyTorch module)."""
    B = x.shape[0]
    Bp = max(8, -(-B // 8) * 8)                              # sublane-padded batch
    x2d = x.astype(jnp.float32).reshape(B, 6 * S_LEN)        # metadata-only reshape
    if Bp != B:
        x2d = jnp.pad(x2d, ((0, Bp - B), (0, 0)))

    vmem = pl.BlockSpec(memory_space=pltpu.MemorySpace.VMEM)
    args = (x2d,
            p["wc"].reshape(3 * FILTER_SIZE, CONV_OUT_DIM),  # [12, 128], free reshape
            p["bc"], p["ws"], p["bs"],
            p["wh"], p["bh"], p["wo"], p["bo"])
    out = pl.pallas_call(
        actor_kernel,
        out_shape=jax.ShapeDtypeStruct((Bp, A_DIM), jnp.float32),
        in_specs=[vmem] * len(args),
        out_specs=vmem,
        scratch_shapes=[pltpu.VMEM((Bp, HIDDEN_DIM), jnp.float32)],
    )(*args)
    return out[:B]


def init_params(key):
    ks = jax.random.split(key, 12)

    def xavier(k, shape, fan_in, fan_out):
        std = (2.0 / (fan_in + fan_out)) ** 0.5
        return std * jax.random.normal(k, shape, jnp.float32)

    # Conv1d weights: torch shape [128, 1, 4] -> kernel layout [4, 128]
    wc = jnp.stack([xavier(ks[i], (FILTER_SIZE, CONV_OUT_DIM),
                           FILTER_SIZE, CONV_OUT_DIM) for i in range(3)])    # [3,4,128]
    bc = jnp.zeros((3, CONV_OUT_DIM), jnp.float32)   # nn.init.constant_(bias, 0.0)

    # Scalar Linear(1 -> 128) weights: torch [128, 1] -> kernel layout [128]
    ws = jnp.stack([xavier(ks[3 + i], (SCA_OUT_DIM,), 1, SCA_OUT_DIM)
                    for i in range(3)])                                      # [3,128]
    bs = jnp.zeros((3, SCA_OUT_DIM), jnp.float32)

    # Hidden layer: torch weight [128, 2048]; keep transposed W_h^T [2048, 128]
    wh_t = xavier(ks[6], (HIDDEN_DIM, SCA_OUT_DIM), HIDDEN_DIM, SCA_OUT_DIM)
    bh = jnp.zeros((1, SCA_OUT_DIM), jnp.float32)

    # Output layer: torch weight [6, 128] -> W^T [128, 6]; bias keeps default
    # (non-zero) PyTorch init -> random here.
    wo = xavier(ks[7], (SCA_OUT_DIM, A_DIM), SCA_OUT_DIM, A_DIM)
    bo = 0.05 * jax.random.normal(ks[8], (1, A_DIM), jnp.float32)

    # --- build the reordered contiguous hidden weight for the fused matmul ---
    # PyTorch concat order: [cb(128), bs(128), tp(640), dt(640), cs(384), cl(128)],
    # conv segments flattened channel-major (row = c*L + t).  Re-order conv
    # segments to time-major (row = t*128 + c) to match the kernel's slab.
    o = 0
    wh_cb = wh_t[o:o + SCA_OUT_DIM]; o += SCA_OUT_DIM
    wh_bs = wh_t[o:o + SCA_OUT_DIM]; o += SCA_OUT_DIM
    seg_tp = wh_t[o:o + CONV_OUT_DIM * L_TP]; o += CONV_OUT_DIM * L_TP
    seg_dt = wh_t[o:o + CONV_OUT_DIM * L_TP]; o += CONV_OUT_DIM * L_TP
    seg_cs = wh_t[o:o + CONV_OUT_DIM * L_CS]; o += CONV_OUT_DIM * L_CS
    wh_cl = wh_t[o:o + SCA_OUT_DIM]; o += SCA_OUT_DIM
    assert o == HIDDEN_DIM

    def to_time_major(seg, n_pos):
        return (seg.reshape(CONV_OUT_DIM, n_pos, SCA_OUT_DIM)
                   .transpose(1, 0, 2)
                   .reshape(n_pos * CONV_OUT_DIM, SCA_OUT_DIM))

    wh = jnp.concatenate([wh_cb, wh_bs,
                          to_time_major(seg_tp, L_TP),
                          to_time_major(seg_dt, L_TP),
                          to_time_major(seg_cs, L_CS),
                          wh_cl], axis=0)                                    # [2048,128]

    return dict(wc=wc, bc=bc, ws=ws, bs=bs, wh=wh, wh_t=wh_t, bh=bh, wo=wo, bo=bo)


def ref_forward(x, p):
    """Pure-JAX reference mirroring the PyTorch forward (explicit concat)."""
    relu = lambda v: jnp.maximum(v, 0.0)
    B = x.shape[0]
    cb = relu(x[:, 0, -1:] * p["ws"][0] + p["bs"][0])                # [B,128]
    bsz = relu(x[:, 1, -1:] * p["ws"][1] + p["bs"][1])
    cl = relu(x[:, 5, -1:] * p["ws"][2] + p["bs"][2])

    def conv(xrow, w, b, n_pos):                                     # torch [B, C, L_out]
        cols = [relu(xrow[:, t:t + FILTER_SIZE] @ w + b) for t in range(n_pos)]
        return jnp.stack(cols, axis=-1)

    tp = conv(x[:, 2, :], p["wc"][0], p["bc"][0], L_TP).reshape(B, -1)
    dt = conv(x[:, 3, :], p["wc"][1], p["bc"][1], L_TP).reshape(B, -1)
    cs = conv(x[:, 4, :A_DIM], p["wc"][2], p["bc"][2], L_CS).reshape(B, -1)
    h_in = jnp.concatenate([cb, bsz, tp, dt, cs, cl], axis=1)        # [B, 2048]
    h = relu(h_in @ p["wh_t"] + p["bh"])
    logits = h @ p["wo"] + p["bo"]
    return jax.nn.softmax(logits, axis=-1)


if __name__ == "__main__":
    key = jax.random.PRNGKey(0)
    pkey, xkey = jax.random.split(key)
    params = init_params(pkey)

    B = 2
    x = jax.random.normal(xkey, (B, 6, S_LEN), jnp.float32)  # [batch, state_dim, S_LEN]

    out = jax.block_until_ready(actor_forward(x, params))
    ref = ref_forward(x, params)

    assert out.shape == (B, A_DIM)
    assert jnp.allclose(jnp.sum(out, axis=-1), 1.0, atol=1e-5)
    assert jnp.allclose(out, ref, atol=1e-5, rtol=1e-5), (out, ref)
    print("KERNEL_OK")
</pallas_src>

<mosaic_0001>
module attributes {stable_mosaic.version = 11 : i64} {
  func.func @actor_kernel(%arg0: memref<8x48xf32, #tpu.memory_space<vmem>>, %arg1: memref<12x128xf32, #tpu.memory_space<vmem>>, %arg2: memref<3x128xf32, #tpu.memory_space<vmem>>, %arg3: memref<3x128xf32, #tpu.memory_space<vmem>>, %arg4: memref<3x128xf32, #tpu.memory_space<vmem>>, %arg5: memref<2048x128xf32, #tpu.memory_space<vmem>>, %arg6: memref<1x128xf32, #tpu.memory_space<vmem>>, %arg7: memref<128x6xf32, #tpu.memory_space<vmem>>, %arg8: memref<1x6xf32, #tpu.memory_space<vmem>>, %arg9: memref<8x6xf32, #tpu.memory_space<vmem>>, %arg10: memref<8x2048xf32, #tpu.memory_space<vmem>>) attributes {dimension_semantics = [], scalar_prefetch = 0 : i64, scratch_operands = 1 : i64, tpu.core_type = #tpu.core_type<tc>} {
    %c0 = arith.constant 0 : index
    %c0_0 = arith.constant 0 : index
    %0 = vector.load %arg0[%c0, %c0_0] : memref<8x48xf32, #tpu.memory_space<vmem>>, vector<8x48xf32>
    %1 = vector.extract_strided_slice %0 {offsets = [0, 7], sizes = [8, 1], strides = [1, 1]} : vector<8x48xf32> to vector<8x1xf32>
    %c0_1 = arith.constant 0 : index
    %c0_2 = arith.constant 0 : index
    %2 = vector.load %arg3[%c0_1, %c0_2] : memref<3x128xf32, #tpu.memory_space<vmem>>, vector<1x128xf32>
    %c0_3 = arith.constant 0 : index
    %c0_4 = arith.constant 0 : index
    %3 = vector.load %arg4[%c0_3, %c0_4] : memref<3x128xf32, #tpu.memory_space<vmem>>, vector<1x128xf32>
    %4 = vector.broadcast %1 : vector<8x1xf32> to vector<8x128xf32>
    %5 = vector.broadcast %2 : vector<1x128xf32> to vector<8x128xf32>
    %6 = arith.mulf %4, %5 : vector<8x128xf32>
    %7 = vector.broadcast %3 : vector<1x128xf32> to vector<8x128xf32>
    %8 = arith.addf %6, %7 : vector<8x128xf32>
    %cst = arith.constant 0.000000e+00 : f32
    %9 = vector.broadcast %cst : f32 to vector<8x128xf32>
    %10 = arith.maximumf %8, %9 : vector<8x128xf32>
    %c0_5 = arith.constant 0 : index
    %c0_6 = arith.constant 0 : index
    %11 = vector.load %arg10[%c0_5, %c0_6] : memref<8x2048xf32, #tpu.memory_space<vmem>>, vector<8x128xf32>
    tpu.vector_store %arg10[%c0_5, %c0_6], %10 {strides = array<i32>} : memref<8x2048xf32, #tpu.memory_space<vmem>>, vector<8x128xf32>,
    %12 = vector.extract_strided_slice %0 {offsets = [0, 15], sizes = [8, 1], strides = [1, 1]} : vector<8x48xf32> to vector<8x1xf32>
    %c1 = arith.constant 1 : index
    %c0_7 = arith.constant 0 : index
    %13 = vector.load %arg3[%c1, %c0_7] : memref<3x128xf32, #tpu.memory_space<vmem>>, vector<1x128xf32>
    %c1_8 = arith.constant 1 : index
    %c0_9 = arith.constant 0 : index
    %14 = vector.load %arg4[%c1_8, %c0_9] : memref<3x128xf32, #tpu.memory_space<vmem>>, vector<1x128xf32>
    %15 = vector.broadcast %12 : vector<8x1xf32> to vector<8x128xf32>
    %16 = vector.broadcast %13 : vector<1x128xf32> to vector<8x128xf32>
    %17 = arith.mulf %15, %16 : vector<8x128xf32>
    %18 = vector.broadcast %14 : vector<1x128xf32> to vector<8x128xf32>
    %19 = arith.addf %17, %18 : vector<8x128xf32>
    %cst_10 = arith.constant 0.000000e+00 : f32
    %20 = vector.broadcast %cst_10 : f32 to vector<8x128xf32>
    %21 = arith.maximumf %19, %20 : vector<8x128xf32>
    %c0_11 = arith.constant 0 : index
    %c128 = arith.constant 128 : index
    %22 = vector.load %arg10[%c0_11, %c128] : memref<8x2048xf32, #tpu.memory_space<vmem>>, vector<8x128xf32>
    tpu.vector_store %arg10[%c0_11, %c128], %21 {strides = array<i32>} : memref<8x2048xf32, #tpu.memory_space<vmem>>, vector<8x128xf32>,
    %23 = vector.extract_strided_slice %0 {offsets = [0, 47], sizes = [8, 1], strides = [1, 1]} : vector<8x48xf32> to vector<8x1xf32>
    %c2 = arith.constant 2 : index
    %c0_12 = arith.constant 0 : index
    %24 = vector.load %arg3[%c2, %c0_12] : memref<3x128xf32, #tpu.memory_space<vmem>>, vector<1x128xf32>
    %c2_13 = arith.constant 2 : index
    %c0_14 = arith.constant 0 : index
    %25 = vector.load %arg4[%c2_13, %c0_14] : memref<3x128xf32, #tpu.memory_space<vmem>>, vector<1x128xf32>
    %26 = vector.broadcast %23 : vector<8x1xf32> to vector<8x128xf32>
    %27 = vector.broadcast %24 : vector<1x128xf32> to vector<8x128xf32>
    %28 = arith.mulf %26, %27 : vector<8x128xf32>
    %29 = vector.broadcast %25 : vector<1x128xf32> to vector<8x128xf32>
    %30 = arith.addf %28, %29 : vector<8x128xf32>
    %cst_15 = arith.constant 0.000000e+00 : f32
    %31 = vector.broadcast %cst_15 : f32 to vector<8x128xf32>
    %32 = arith.maximumf %30, %31 : vector<8x128xf32>
    %c0_16 = arith.constant 0 : index
    %c1920 = arith.constant 1920 : index
    %33 = vector.load %arg10[%c0_16, %c1920] : memref<8x2048xf32, #tpu.memory_space<vmem>>, vector<8x128xf32>
    tpu.vector_store %arg10[%c0_16, %c1920], %32 {strides = array<i32>} : memref<8x2048xf32, #tpu.memory_space<vmem>>, vector<8x128xf32>,
    %34 = vector.extract_strided_slice %0 {offsets = [0, 16], sizes = [8, 1], strides = [1, 1]} : vector<8x48xf32> to vector<8x1xf32>
    %35 = vector.shape_cast %34 : vector<8x1xf32> to vector<8x1xf32>
    %36 = vector.broadcast %35 : vector<8x1xf32> to vector<8x128xf32>
    %37 = vector.extract_strided_slice %0 {offsets = [0, 17], sizes = [8, 1], strides = [1, 1]} : vector<8x48xf32> to vector<8x1xf32>
    %38 = vector.shape_cast %37 : vector<8x1xf32> to vector<8x1xf32>
    %39 = vector.broadcast %38 : vector<8x1xf32> to vector<8x128xf32>
    %40 = vector.extract_strided_slice %0 {offsets = [0, 18], sizes = [8, 1], strides = [1, 1]} : vector<8x48xf32> to vector<8x1xf32>
    %41 = vector.shape_cast %40 : vector<8x1xf32> to vector<8x1xf32>
    %42 = vector.broadcast %41 : vector<8x1xf32> to vector<8x128xf32>
    %43 = vector.extract_strided_slice %0 {offsets = [0, 19], sizes = [8, 1], strides = [1, 1]} : vector<8x48xf32> to vector<8x1xf32>
    %44 = vector.shape_cast %43 : vector<8x1xf32> to vector<8x1xf32>
    %45 = vector.broadcast %44 : vector<8x1xf32> to vector<8x128xf32>
    %46 = vector.extract_strided_slice %0 {offsets = [0, 20], sizes = [8, 1], strides = [1, 1]} : vector<8x48xf32> to vector<8x1xf32>
    %47 = vector.shape_cast %46 : vector<8x1xf32> to vector<8x1xf32>
    %48 = vector.broadcast %47 : vector<8x1xf32> to vector<8x128xf32>
    %49 = vector.extract_strided_slice %0 {offsets = [0, 21], sizes = [8, 1], strides = [1, 1]} : vector<8x48xf32> to vector<8x1xf32>
    %50 = vector.shape_cast %49 : vector<8x1xf32> to vector<8x1xf32>
    %51 = vector.broadcast %50 : vector<8x1xf32> to vector<8x128xf32>
    %52 = vector.extract_strided_slice %0 {offsets = [0, 22], sizes = [8, 1], strides = [1, 1]} : vector<8x48xf32> to vector<8x1xf32>
    %53 = vector.shape_cast %52 : vector<8x1xf32> to vector<8x1xf32>
    %54 = vector.broadcast %53 : vector<8x1xf32> to vector<8x128xf32>
    %55 = vector.extract_strided_slice %0 {offsets = [0, 23], sizes = [8, 1], strides = [1, 1]} : vector<8x48xf32> to vector<8x1xf32>
    %56 = vector.shape_cast %55 : vector<8x1xf32> to vector<8x1xf32>
    %57 = vector.broadcast %56 : vector<8x1xf32> to vector<8x128xf32>
    %c0_17 = arith.constant 0 : index
    %c0_18 = arith.constant 0 : index
    %58 = vector.load %arg1[%c0_17, %c0_18] : memref<12x128xf32, #tpu.memory_space<vmem>>, vector<1x128xf32>
    %c1_19 = arith.constant 1 : index
    %c0_20 = arith.constant 0 : index
    %59 = vector.load %arg1[%c1_19, %c0_20] : memref<12x128xf32, #tpu.memory_space<vmem>>, vector<1x128xf32>
    %c2_21 = arith.constant 2 : index
    %c0_22 = arith.constant 0 : index
    %60 = vector.load %arg1[%c2_21, %c0_22] : memref<12x128xf32, #tpu.memory_space<vmem>>, vector<1x128xf32>
    %c3 = arith.constant 3 : index
    %c0_23 = arith.constant 0 : index
    %61 = vector.load %arg1[%c3, %c0_23] : memref<12x128xf32, #tpu.memory_space<vmem>>, vector<1x128xf32>
    %c0_24 = arith.constant 0 : index
    %c0_25 = arith.constant 0 : index
    %62 = vector.load %arg2[%c0_24, %c0_25] : memref<3x128xf32, #tpu.memory_space<vmem>>, vector<1x128xf32>
    %63 = vector.broadcast %58 : vector<1x128xf32> to vector<8x128xf32>
    %64 = arith.mulf %36, %63 : vector<8x128xf32>
    %65 = vector.broadcast %62 : vector<1x128xf32> to vector<8x128xf32>
    %66 = arith.addf %65, %64 : vector<8x128xf32>
    %67 = vector.broadcast %59 : vector<1x128xf32> to vector<8x128xf32>
    %68 = arith.mulf %39, %67 : vector<8x128xf32>
    %69 = arith.addf %66, %68 : vector<8x128xf32>
    %70 = vector.broadcast %60 : vector<1x128xf32> to vector<8x128xf32>
    %71 = arith.mulf %42, %70 : vector<8x128xf32>
    %72 = arith.addf %69, %71 : vector<8x128xf32>
    %73 = vector.broadcast %61 : vector<1x128xf32> to vector<8x128xf32>
    %74 = arith.mulf %45, %73 : vector<8x128xf32>
    %75 = arith.addf %72, %74 : vector<8x128xf32>
    %cst_26 = arith.constant 0.000000e+00 : f32
    %76 = vector.broadcast %cst_26 : f32 to vector<8x128xf32>
    %77 = arith.maximumf %75, %76 : vector<8x128xf32>
    %c0_27 = arith.constant 0 : index
    %c256 = arith.constant 256 : index
    %78 = vector.load %arg10[%c0_27, %c256] : memref<8x2048xf32, #tpu.memory_space<vmem>>, vector<8x128xf32>
    tpu.vector_store %arg10[%c0_27, %c256], %77 {strides = array<i32>} : memref<8x2048xf32, #tpu.memory_space<vmem>>, vector<8x128xf32>,
    %79 = vector.broadcast %58 : vector<1x128xf32> to vector<8x128xf32>
    %80 = arith.mulf %39, %79 : vector<8x128xf32>
    %81 = vector.broadcast %62 : vector<1x128xf32> to vector<8x128xf32>
    %82 = arith.addf %81, %80 : vector<8x128xf32>
    %83 = vector.broadcast %59 : vector<1x128xf32> to vector<8x128xf32>
    %84 = arith.mulf %42, %83 : vector<8x128xf32>
    %85 = arith.addf %82, %84 : vector<8x128xf32>
    %86 = vector.broadcast %60 : vector<1x128xf32> to vector<8x128xf32>
    %87 = arith.mulf %45, %86 : vector<8x128xf32>
    %88 = arith.addf %85, %87 : vector<8x128xf32>
    %89 = vector.broadcast %61 : vector<1x128xf32> to vector<8x128xf32>
    %90 = arith.mulf %48, %89 : vector<8x128xf32>
    %91 = arith.addf %88, %90 : vector<8x128xf32>
    %cst_28 = arith.constant 0.000000e+00 : f32
    %92 = vector.broadcast %cst_28 : f32 to vector<8x128xf32>
    %93 = arith.maximumf %91, %92 : vector<8x128xf32>
    %c0_29 = arith.constant 0 : index
    %c384 = arith.constant 384 : index
    %94 = vector.load %arg10[%c0_29, %c384] : memref<8x2048xf32, #tpu.memory_space<vmem>>, vector<8x128xf32>
    tpu.vector_store %arg10[%c0_29, %c384], %93 {strides = array<i32>} : memref<8x2048xf32, #tpu.memory_space<vmem>>, vector<8x128xf32>,
    %95 = vector.broadcast %58 : vector<1x128xf32> to vector<8x128xf32>
    %96 = arith.mulf %42, %95 : vector<8x128xf32>
    %97 = vector.broadcast %62 : vector<1x128xf32> to vector<8x128xf32>
    %98 = arith.addf %97, %96 : vector<8x128xf32>
    %99 = vector.broadcast %59 : vector<1x128xf32> to vector<8x128xf32>
    %100 = arith.mulf %45, %99 : vector<8x128xf32>
    %101 = arith.addf %98, %100 : vector<8x128xf32>
    %102 = vector.broadcast %60 : vector<1x128xf32> to vector<8x128xf32>
    %103 = arith.mulf %48, %102 : vector<8x128xf32>
    %104 = arith.addf %101, %103 : vector<8x128xf32>
    %105 = vector.broadcast %61 : vector<1x128xf32> to vector<8x128xf32>
    %106 = arith.mulf %51, %105 : vector<8x128xf32>
    %107 = arith.addf %104, %106 : vector<8x128xf32>
    %cst_30 = arith.constant 0.000000e+00 : f32
    %108 = vector.broadcast %cst_30 : f32 to vector<8x128xf32>
    %109 = arith.maximumf %107, %108 : vector<8x128xf32>
    %c0_31 = arith.constant 0 : index
    %c512 = arith.constant 512 : index
    %110 = vector.load %arg10[%c0_31, %c512] : memref<8x2048xf32, #tpu.memory_space<vmem>>, vector<8x128xf32>
    tpu.vector_store %arg10[%c0_31, %c512], %109 {strides = array<i32>} : memref<8x2048xf32, #tpu.memory_space<vmem>>, vector<8x128xf32>,
    %111 = vector.broadcast %58 : vector<1x128xf32> to vector<8x128xf32>
    %112 = arith.mulf %45, %111 : vector<8x128xf32>
    %113 = vector.broadcast %62 : vector<1x128xf32> to vector<8x128xf32>
    %114 = arith.addf %113, %112 : vector<8x128xf32>
    %115 = vector.broadcast %59 : vector<1x128xf32> to vector<8x128xf32>
    %116 = arith.mulf %48, %115 : vector<8x128xf32>
    %117 = arith.addf %114, %116 : vector<8x128xf32>
    %118 = vector.broadcast %60 : vector<1x128xf32> to vector<8x128xf32>
    %119 = arith.mulf %51, %118 : vector<8x128xf32>
    %120 = arith.addf %117, %119 : vector<8x128xf32>
    %121 = vector.broadcast %61 : vector<1x128xf32> to vector<8x128xf32>
    %122 = arith.mulf %54, %121 : vector<8x128xf32>
    %123 = arith.addf %120, %122 : vector<8x128xf32>
    %cst_32 = arith.constant 0.000000e+00 : f32
    %124 = vector.broadcast %cst_32 : f32 to vector<8x128xf32>
    %125 = arith.maximumf %123, %124 : vector<8x128xf32>
    %c0_33 = arith.constant 0 : index
    %c640 = arith.constant 640 : index
    %126 = vector.load %arg10[%c0_33, %c640] : memref<8x2048xf32, #tpu.memory_space<vmem>>, vector<8x128xf32>
    tpu.vector_store %arg10[%c0_33, %c640], %125 {strides = array<i32>} : memref<8x2048xf32, #tpu.memory_space<vmem>>, vector<8x128xf32>,
    %127 = vector.broadcast %58 : vector<1x128xf32> to vector<8x128xf32>
    %128 = arith.mulf %48, %127 : vector<8x128xf32>
    %129 = vector.broadcast %62 : vector<1x128xf32> to vector<8x128xf32>
    %130 = arith.addf %129, %128 : vector<8x128xf32>
    %131 = vector.broadcast %59 : vector<1x128xf32> to vector<8x128xf32>
    %132 = arith.mulf %51, %131 : vector<8x128xf32>
    %133 = arith.addf %130, %132 : vector<8x128xf32>
    %134 = vector.broadcast %60 : vector<1x128xf32> to vector<8x128xf32>
    %135 = arith.mulf %54, %134 : vector<8x128xf32>
    %136 = arith.addf %133, %135 : vector<8x128xf32>
    %137 = vector.broadcast %61 : vector<1x128xf32> to vector<8x128xf32>
    %138 = arith.mulf %57, %137 : vector<8x128xf32>
    %139 = arith.addf %136, %138 : vector<8x128xf32>
    %cst_34 = arith.constant 0.000000e+00 : f32
    %140 = vector.broadcast %cst_34 : f32 to vector<8x128xf32>
    %141 = arith.maximumf %139, %140 : vector<8x128xf32>
    %c0_35 = arith.constant 0 : index
    %c768 = arith.constant 768 : index
    %142 = vector.load %arg10[%c0_35, %c768] : memref<8x2048xf32, #tpu.memory_space<vmem>>, vector<8x128xf32>
    tpu.vector_store %arg10[%c0_35, %c768], %141 {strides = array<i32>} : memref<8x2048xf32, #tpu.memory_space<vmem>>, vector<8x128xf32>,
    %143 = vector.extract_strided_slice %0 {offsets = [0, 24], sizes = [8, 1], strides = [1, 1]} : vector<8x48xf32> to vector<8x1xf32>
    %144 = vector.shape_cast %143 : vector<8x1xf32> to vector<8x1xf32>
    %145 = vector.broadcast %144 : vector<8x1xf32> to vector<8x128xf32>
    %146 = vector.extract_strided_slice %0 {offsets = [0, 25], sizes = [8, 1], strides = [1, 1]} : vector<8x48xf32> to vector<8x1xf32>
    %147 = vector.shape_cast %146 : vector<8x1xf32> to vector<8x1xf32>
    %148 = vector.broadcast %147 : vector<8x1xf32> to vector<8x128xf32>
    %149 = vector.extract_strided_slice %0 {offsets = [0, 26], sizes = [8, 1], strides = [1, 1]} : vector<8x48xf32> to vector<8x1xf32>
    %150 = vector.shape_cast %149 : vector<8x1xf32> to vector<8x1xf32>
    %151 = vector.broadcast %150 : vector<8x1xf32> to vector<8x128xf32>
    %152 = vector.extract_strided_slice %0 {offsets = [0, 27], sizes = [8, 1], strides = [1, 1]} : vector<8x48xf32> to vector<8x1xf32>
    %153 = vector.shape_cast %152 : vector<8x1xf32> to vector<8x1xf32>
    %154 = vector.broadcast %153 : vector<8x1xf32> to vector<8x128xf32>
    %155 = vector.extract_strided_slice %0 {offsets = [0, 28], sizes = [8, 1], strides = [1, 1]} : vector<8x48xf32> to vector<8x1xf32>
    %156 = vector.shape_cast %155 : vector<8x1xf32> to vector<8x1xf32>
    %157 = vector.broadcast %156 : vector<8x1xf32> to vector<8x128xf32>
    %158 = vector.extract_strided_slice %0 {offsets = [0, 29], sizes = [8, 1], strides = [1, 1]} : vector<8x48xf32> to vector<8x1xf32>
    %159 = vector.shape_cast %158 : vector<8x1xf32> to vector<8x1xf32>
    %160 = vector.broadcast %159 : vector<8x1xf32> to vector<8x128xf32>
    %161 = vector.extract_strided_slice %0 {offsets = [0, 30], sizes = [8, 1], strides = [1, 1]} : vector<8x48xf32> to vector<8x1xf32>
    %162 = vector.shape_cast %161 : vector<8x1xf32> to vector<8x1xf32>
    %163 = vector.broadcast %162 : vector<8x1xf32> to vector<8x128xf32>
    %164 = vector.extract_strided_slice %0 {offsets = [0, 31], sizes = [8, 1], strides = [1, 1]} : vector<8x48xf32> to vector<8x1xf32>
    %165 = vector.shape_cast %164 : vector<8x1xf32> to vector<8x1xf32>
    %166 = vector.broadcast %165 : vector<8x1xf32> to vector<8x128xf32>
    %c4 = arith.constant 4 : index
    %c0_36 = arith.constant 0 : index
    %167 = vector.load %arg1[%c4, %c0_36] : memref<12x128xf32, #tpu.memory_space<vmem>>, vector<1x128xf32>
    %c5 = arith.constant 5 : index
    %c0_37 = arith.constant 0 : index
    %168 = vector.load %arg1[%c5, %c0_37] : memref<12x128xf32, #tpu.memory_space<vmem>>, vector<1x128xf32>
    %c6 = arith.constant 6 : index
    %c0_38 = arith.constant 0 : index
    %169 = vector.load %arg1[%c6, %c0_38] : memref<12x128xf32, #tpu.memory_space<vmem>>, vector<1x128xf32>
    %c7 = arith.constant 7 : index
    %c0_39 = arith.constant 0 : index
    %170 = vector.load %arg1[%c7, %c0_39] : memref<12x128xf32, #tpu.memory_space<vmem>>, vector<1x128xf32>
    %c1_40 = arith.constant 1 : index
    %c0_41 = arith.constant 0 : index
    %171 = vector.load %arg2[%c1_40, %c0_41] : memref<3x128xf32, #tpu.memory_space<vmem>>, vector<1x128xf32>
    %172 = vector.broadcast %167 : vector<1x128xf32> to vector<8x128xf32>
    %173 = arith.mulf %145, %172 : vector<8x128xf32>
    %174 = vector.broadcast %171 : vector<1x128xf32> to vector<8x128xf32>
    %175 = arith.addf %174, %173 : vector<8x128xf32>
    %176 = vector.broadcast %168 : vector<1x128xf32> to vector<8x128xf32>
    %177 = arith.mulf %148, %176 : vector<8x128xf32>
    %178 = arith.addf %175, %177 : vector<8x128xf32>
    %179 = vector.broadcast %169 : vector<1x128xf32> to vector<8x128xf32>
    %180 = arith.mulf %151, %179 : vector<8x128xf32>
    %181 = arith.addf %178, %180 : vector<8x128xf32>
    %182 = vector.broadcast %170 : vector<1x128xf32> to vector<8x128xf32>
    %183 = arith.mulf %154, %182 : vector<8x128xf32>
    %184 = arith.addf %181, %183 : vector<8x128xf32>
    %cst_42 = arith.constant 0.000000e+00 : f32
    %185 = vector.broadcast %cst_42 : f32 to vector<8x128xf32>
    %186 = arith.maximumf %184, %185 : vector<8x128xf32>
    %c0_43 = arith.constant 0 : index
    %c896 = arith.constant 896 : index
    %187 = vector.load %arg10[%c0_43, %c896] : memref<8x2048xf32, #tpu.memory_space<vmem>>, vector<8x128xf32>
    tpu.vector_store %arg10[%c0_43, %c896], %186 {strides = array<i32>} : memref<8x2048xf32, #tpu.memory_space<vmem>>, vector<8x128xf32>,
    %188 = vector.broadcast %167 : vector<1x128xf32> to vector<8x128xf32>
    %189 = arith.mulf %148, %188 : vector<8x128xf32>
    %190 = vector.broadcast %171 : vector<1x128xf32> to vector<8x128xf32>
    %191 = arith.addf %190, %189 : vector<8x128xf32>
    %192 = vector.broadcast %168 : vector<1x128xf32> to vector<8x128xf32>
    %193 = arith.mulf %151, %192 : vector<8x128xf32>
    %194 = arith.addf %191, %193 : vector<8x128xf32>
    %195 = vector.broadcast %169 : vector<1x128xf32> to vector<8x128xf32>
    %196 = arith.mulf %154, %195 : vector<8x128xf32>
    %197 = arith.addf %194, %196 : vector<8x128xf32>
    %198 = vector.broadcast %170 : vector<1x128xf32> to vector<8x128xf32>
    %199 = arith.mulf %157, %198 : vector<8x128xf32>
    %200 = arith.addf %197, %199 : vector<8x128xf32>
    %cst_44 = arith.constant 0.000000e+00 : f32
    %201 = vector.broadcast %cst_44 : f32 to vector<8x128xf32>
    %202 = arith.maximumf %200, %201 : vector<8x128xf32>
    %c0_45 = arith.constant 0 : index
    %c1024 = arith.constant 1024 : index
    %203 = vector.load %arg10[%c0_45, %c1024] : memref<8x2048xf32, #tpu.memory_space<vmem>>, vector<8x128xf32>
    tpu.vector_store %arg10[%c0_45, %c1024], %202 {strides = array<i32>} : memref<8x2048xf32, #tpu.memory_space<vmem>>, vector<8x128xf32>,
    %204 = vector.broadcast %167 : vector<1x128xf32> to vector<8x128xf32>
    %205 = arith.mulf %151, %204 : vector<8x128xf32>
    %206 = vector.broadcast %171 : vector<1x128xf32> to vector<8x128xf32>
    %207 = arith.addf %206, %205 : vector<8x128xf32>
    %208 = vector.broadcast %168 : vector<1x128xf32> to vector<8x128xf32>
    %209 = arith.mulf %154, %208 : vector<8x128xf32>
    %210 = arith.addf %207, %209 : vector<8x128xf32>
    %211 = vector.broadcast %169 : vector<1x128xf32> to vector<8x128xf32>
    %212 = arith.mulf %157, %211 : vector<8x128xf32>
    %213 = arith.addf %210, %212 : vector<8x128xf32>
    %214 = vector.broadcast %170 : vector<1x128xf32> to vector<8x128xf32>
    %215 = arith.mulf %160, %214 : vector<8x128xf32>
    %216 = arith.addf %213, %215 : vector<8x128xf32>
    %cst_46 = arith.constant 0.000000e+00 : f32
    %217 = vector.broadcast %cst_46 : f32 to vector<8x128xf32>
    %218 = arith.maximumf %216, %217 : vector<8x128xf32>
    %c0_47 = arith.constant 0 : index
    %c1152 = arith.constant 1152 : index
    %219 = vector.load %arg10[%c0_47, %c1152] : memref<8x2048xf32, #tpu.memory_space<vmem>>, vector<8x128xf32>
    tpu.vector_store %arg10[%c0_47, %c1152], %218 {strides = array<i32>} : memref<8x2048xf32, #tpu.memory_space<vmem>>, vector<8x128xf32>,
    %220 = vector.broadcast %167 : vector<1x128xf32> to vector<8x128xf32>
    %221 = arith.mulf %154, %220 : vector<8x128xf32>
    %222 = vector.broadcast %171 : vector<1x128xf32> to vector<8x128xf32>
    %223 = arith.addf %222, %221 : vector<8x128xf32>
    %224 = vector.broadcast %168 : vector<1x128xf32> to vector<8x128xf32>
    %225 = arith.mulf %157, %224 : vector<8x128xf32>
    %226 = arith.addf %223, %225 : vector<8x128xf32>
    %227 = vector.broadcast %169 : vector<1x128xf32> to vector<8x128xf32>
    %228 = arith.mulf %160, %227 : vector<8x128xf32>
    %229 = arith.addf %226, %228 : vector<8x128xf32>
    %230 = vector.broadcast %170 : vector<1x128xf32> to vector<8x128xf32>
    %231 = arith.mulf %163, %230 : vector<8x128xf32>
    %232 = arith.addf %229, %231 : vector<8x128xf32>
    %cst_48 = arith.constant 0.000000e+00 : f32
    %233 = vector.broadcast %cst_48 : f32 to vector<8x128xf32>
    %234 = arith.maximumf %232, %233 : vector<8x128xf32>
    %c0_49 = arith.constant 0 : index
    %c1280 = arith.constant 1280 : index
    %235 = vector.load %arg10[%c0_49, %c1280] : memref<8x2048xf32, #tpu.memory_space<vmem>>, vector<8x128xf32>
    tpu.vector_store %arg10[%c0_49, %c1280], %234 {strides = array<i32>} : memref<8x2048xf32, #tpu.memory_space<vmem>>, vector<8x128xf32>,
    %236 = vector.broadcast %167 : vector<1x128xf32> to vector<8x128xf32>
    %237 = arith.mulf %157, %236 : vector<8x128xf32>
    %238 = vector.broadcast %171 : vector<1x128xf32> to vector<8x128xf32>
    %239 = arith.addf %238, %237 : vector<8x128xf32>
    %240 = vector.broadcast %168 : vector<1x128xf32> to vector<8x128xf32>
    %241 = arith.mulf %160, %240 : vector<8x128xf32>
    %242 = arith.addf %239, %241 : vector<8x128xf32>
    %243 = vector.broadcast %169 : vector<1x128xf32> to vector<8x128xf32>
    %244 = arith.mulf %163, %243 : vector<8x128xf32>
    %245 = arith.addf %242, %244 : vector<8x128xf32>
    %246 = vector.broadcast %170 : vector<1x128xf32> to vector<8x128xf32>
    %247 = arith.mulf %166, %246 : vector<8x128xf32>
    %248 = arith.addf %245, %247 : vector<8x128xf32>
    %cst_50 = arith.constant 0.000000e+00 : f32
    %249 = vector.broadcast %cst_50 : f32 to vector<8x128xf32>
    %250 = arith.maximumf %248, %249 : vector<8x128xf32>
    %c0_51 = arith.constant 0 : index
    %c1408 = arith.constant 1408 : index
    %251 = vector.load %arg10[%c0_51, %c1408] : memref<8x2048xf32, #tpu.memory_space<vmem>>, vector<8x128xf32>
    tpu.vector_store %arg10[%c0_51, %c1408], %250 {strides = array<i32>} : memref<8x2048xf32, #tpu.memory_space<vmem>>, vector<8x128xf32>,
    %252 = vector.extract_strided_slice %0 {offsets = [0, 32], sizes = [8, 1], strides = [1, 1]} : vector<8x48xf32> to vector<8x1xf32>
    %253 = vector.shape_cast %252 : vector<8x1xf32> to vector<8x1xf32>
    %254 = vector.broadcast %253 : vector<8x1xf32> to vector<8x128xf32>
    %255 = vector.extract_strided_slice %0 {offsets = [0, 33], sizes = [8, 1], strides = [1, 1]} : vector<8x48xf32> to vector<8x1xf32>
    %256 = vector.shape_cast %255 : vector<8x1xf32> to vector<8x1xf32>
    %257 = vector.broadcast %256 : vector<8x1xf32> to vector<8x128xf32>
    %258 = vector.extract_strided_slice %0 {offsets = [0, 34], sizes = [8, 1], strides = [1, 1]} : vector<8x48xf32> to vector<8x1xf32>
    %259 = vector.shape_cast %258 : vector<8x1xf32> to vector<8x1xf32>
    %260 = vector.broadcast %259 : vector<8x1xf32> to vector<8x128xf32>
    %261 = vector.extract_strided_slice %0 {offsets = [0, 35], sizes = [8, 1], strides = [1, 1]} : vector<8x48xf32> to vector<8x1xf32>
    %262 = vector.shape_cast %261 : vector<8x1xf32> to vector<8x1xf32>
    %263 = vector.broadcast %262 : vector<8x1xf32> to vector<8x128xf32>
    %264 = vector.extract_strided_slice %0 {offsets = [0, 36], sizes = [8, 1], strides = [1, 1]} : vector<8x48xf32> to vector<8x1xf32>
    %265 = vector.shape_cast %264 : vector<8x1xf32> to vector<8x1xf32>
    %266 = vector.broadcast %265 : vector<8x1xf32> to vector<8x128xf32>
    %267 = vector.extract_strided_slice %0 {offsets = [0, 37], sizes = [8, 1], strides = [1, 1]} : vector<8x48xf32> to vector<8x1xf32>
    %268 = vector.shape_cast %267 : vector<8x1xf32> to vector<8x1xf32>
    %269 = vector.broadcast %268 : vector<8x1xf32> to vector<8x128xf32>
    %c8 = arith.constant 8 : index
    %c0_52 = arith.constant 0 : index
    %270 = vector.load %arg1[%c8, %c0_52] : memref<12x128xf32, #tpu.memory_space<vmem>>, vector<1x128xf32>
    %c9 = arith.constant 9 : index
    %c0_53 = arith.constant 0 : index
    %271 = vector.load %arg1[%c9, %c0_53] : memref<12x128xf32, #tpu.memory_space<vmem>>, vector<1x128xf32>
    %c10 = arith.constant 10 : index
    %c0_54 = arith.constant 0 : index
    %272 = vector.load %arg1[%c10, %c0_54] : memref<12x128xf32, #tpu.memory_space<vmem>>, vector<1x128xf32>
    %c11 = arith.constant 11 : index
    %c0_55 = arith.constant 0 : index
    %273 = vector.load %arg1[%c11, %c0_55] : memref<12x128xf32, #tpu.memory_space<vmem>>, vector<1x128xf32>
    %c2_56 = arith.constant 2 : index
    %c0_57 = arith.constant 0 : index
    %274 = vector.load %arg2[%c2_56, %c0_57] : memref<3x128xf32, #tpu.memory_space<vmem>>, vector<1x128xf32>
    %275 = vector.broadcast %270 : vector<1x128xf32> to vector<8x128xf32>
    %276 = arith.mulf %254, %275 : vector<8x128xf32>
    %277 = vector.broadcast %274 : vector<1x128xf32> to vector<8x128xf32>
    %278 = arith.addf %277, %276 : vector<8x128xf32>
    %279 = vector.broadcast %271 : vector<1x128xf32> to vector<8x128xf32>
    %280 = arith.mulf %257, %279 : vector<8x128xf32>
    %281 = arith.addf %278, %280 : vector<8x128xf32>
    %282 = vector.broadcast %272 : vector<1x128xf32> to vector<8x128xf32>
    %283 = arith.mulf %260, %282 : vector<8x128xf32>
    %284 = arith.addf %281, %283 : vector<8x128xf32>
    %285 = vector.broadcast %273 : vector<1x128xf32> to vector<8x128xf32>
    %286 = arith.mulf %263, %285 : vector<8x128xf32>
    %287 = arith.addf %284, %286 : vector<8x128xf32>
    %cst_58 = arith.constant 0.000000e+00 : f32
    %288 = vector.broadcast %cst_58 : f32 to vector<8x128xf32>
    %289 = arith.maximumf %287, %288 : vector<8x128xf32>
    %c0_59 = arith.constant 0 : index
    %c1536 = arith.constant 1536 : index
    %290 = vector.load %arg10[%c0_59, %c1536] : memref<8x2048xf32, #tpu.memory_space<vmem>>, vector<8x128xf32>
    tpu.vector_store %arg10[%c0_59, %c1536], %289 {strides = array<i32>} : memref<8x2048xf32, #tpu.memory_space<vmem>>, vector<8x128xf32>,
    %291 = vector.broadcast %270 : vector<1x128xf32> to vector<8x128xf32>
    %292 = arith.mulf %257, %291 : vector<8x128xf32>
    %293 = vector.broadcast %274 : vector<1x128xf32> to vector<8x128xf32>
    %294 = arith.addf %293, %292 : vector<8x128xf32>
    %295 = vector.broadcast %271 : vector<1x128xf32> to vector<8x128xf32>
    %296 = arith.mulf %260, %295 : vector<8x128xf32>
    %297 = arith.addf %294, %296 : vector<8x128xf32>
    %298 = vector.broadcast %272 : vector<1x128xf32> to vector<8x128xf32>
    %299 = arith.mulf %263, %298 : vector<8x128xf32>
    %300 = arith.addf %297, %299 : vector<8x128xf32>
    %301 = vector.broadcast %273 : vector<1x128xf32> to vector<8x128xf32>
    %302 = arith.mulf %266, %301 : vector<8x128xf32>
    %303 = arith.addf %300, %302 : vector<8x128xf32>
    %cst_60 = arith.constant 0.000000e+00 : f32
    %304 = vector.broadcast %cst_60 : f32 to vector<8x128xf32>
    %305 = arith.maximumf %303, %304 : vector<8x128xf32>
    %c0_61 = arith.constant 0 : index
    %c1664 = arith.constant 1664 : index
    %306 = vector.load %arg10[%c0_61, %c1664] : memref<8x2048xf32, #tpu.memory_space<vmem>>, vector<8x128xf32>
    tpu.vector_store %arg10[%c0_61, %c1664], %305 {strides = array<i32>} : memref<8x2048xf32, #tpu.memory_space<vmem>>, vector<8x128xf32>,
    %307 = vector.broadcast %270 : vector<1x128xf32> to vector<8x128xf32>
    %308 = arith.mulf %260, %307 : vector<8x128xf32>
    %309 = vector.broadcast %274 : vector<1x128xf32> to vector<8x128xf32>
    %310 = arith.addf %309, %308 : vector<8x128xf32>
    %311 = vector.broadcast %271 : vector<1x128xf32> to vector<8x128xf32>
    %312 = arith.mulf %263, %311 : vector<8x128xf32>
    %313 = arith.addf %310, %312 : vector<8x128xf32>
    %314 = vector.broadcast %272 : vector<1x128xf32> to vector<8x128xf32>
    %315 = arith.mulf %266, %314 : vector<8x128xf32>
    %316 = arith.addf %313, %315 : vector<8x128xf32>
    %317 = vector.broadcast %273 : vector<1x128xf32> to vector<8x128xf32>
    %318 = arith.mulf %269, %317 : vector<8x128xf32>
    %319 = arith.addf %316, %318 : vector<8x128xf32>
    %cst_62 = arith.constant 0.000000e+00 : f32
    %320 = vector.broadcast %cst_62 : f32 to vector<8x128xf32>
    %321 = arith.maximumf %319, %320 : vector<8x128xf32>
    %c0_63 = arith.constant 0 : index
    %c1792 = arith.constant 1792 : index
    %322 = vector.load %arg10[%c0_63, %c1792] : memref<8x2048xf32, #tpu.memory_space<vmem>>, vector<8x128xf32>
    tpu.vector_store %arg10[%c0_63, %c1792], %321 {strides = array<i32>} : memref<8x2048xf32, #tpu.memory_space<vmem>>, vector<8x128xf32>,
    %c0_64 = arith.constant 0 : index
    %c0_65 = arith.constant 0 : index
    %323 = vector.load %arg10[%c0_64, %c0_65] : memref<8x2048xf32, #tpu.memory_space<vmem>>, vector<8x2048xf32>
    %c0_66 = arith.constant 0 : index
    %c0_67 = arith.constant 0 : index
    %324 = vector.load %arg5[%c0_66, %c0_67] : memref<2048x128xf32, #tpu.memory_space<vmem>>, vector<2048x128xf32>
    %cst_68 = arith.constant dense<0.000000e+00> : vector<8x128xf32>
    %325 = tpu.matmul %323, %324, %cst_68 {dimension_numbers = #tpu.dot_dimension_numbers<[1], [0], [0], [1], [0, 0, 1, 1], [], []>} : vector<8x2048xf32>, vector<2048x128xf32>, vector<8x128xf32> -> vector<8x128xf32>
    %c0_69 = arith.constant 0 : index
    %c0_70 = arith.constant 0 : index
    %326 = vector.load %arg6[%c0_69, %c0_70] : memref<1x128xf32, #tpu.memory_space<vmem>>, vector<1x128xf32>
    %327 = vector.broadcast %326 : vector<1x128xf32> to vector<8x128xf32>
    %328 = arith.addf %325, %327 : vector<8x128xf32>
    %cst_71 = arith.constant 0.000000e+00 : f32
    %329 = vector.broadcast %cst_71 : f32 to vector<8x128xf32>
    %330 = arith.maximumf %328, %329 : vector<8x128xf32>
    %c0_72 = arith.constant 0 : index
    %c0_73 = arith.constant 0 : index
    %331 = vector.load %arg7[%c0_72, %c0_73] : memref<128x6xf32, #tpu.memory_space<vmem>>, vector<128x6xf32>
    %cst_74 = arith.constant dense<0.000000e+00> : vector<8x6xf32>
    %332 = tpu.matmul %330, %331, %cst_74 {dimension_numbers = #tpu.dot_dimension_numbers<[1], [0], [0], [1], [0, 0, 1, 1], [], []>} : vector<8x128xf32>, vector<128x6xf32>, vector<8x6xf32> -> vector<8x6xf32>
    %c0_75 = arith.constant 0 : index
    %c0_76 = arith.constant 0 : index
    %333 = vector.load %arg8[%c0_75, %c0_76] : memref<1x6xf32, #tpu.memory_space<vmem>>, vector<1x6xf32>
    %334 = vector.broadcast %333 : vector<1x6xf32> to vector<8x6xf32>
    %335 = arith.addf %332, %334 : vector<8x6xf32>
    %cst_77 = arith.constant dense<0xFF800000> : vector<8xf32>
    %336 = vector.multi_reduction <maximumf>, %335, %cst_77 [1] : vector<8x6xf32> to vector<8xf32>
    %337 = vector.shape_cast %336 : vector<8xf32> to vector<8x1xf32>
    %338 = vector.broadcast %337 : vector<8x1xf32> to vector<8x6xf32>
    %339 = arith.subf %335, %338 : vector<8x6xf32>
    %340 = math.exp %339 : vector<8x6xf32>
    %cst_78 = arith.constant dense<0.000000e+00> : vector<8xf32>
    %341 = vector.multi_reduction <add>, %340, %cst_78 [1] : vector<8x6xf32> to vector<8xf32>
    %342 = vector.shape_cast %341 : vector<8xf32> to vector<8x1xf32>
    %343 = vector.broadcast %342 : vector<8x1xf32> to vector<8x6xf32>
    %344 = arith.divf %340, %343 : vector<8x6xf32>
    %c0_79 = arith.constant 0 : index
    %c0_80 = arith.constant 0 : index
    %345 = vector.load %arg9[%c0_79, %c0_80] : memref<8x6xf32, #tpu.memory_space<vmem>>, vector<8x6xf32>
    tpu.vector_store %arg9[%c0_79, %c0_80], %344 {strides = array<i32>} : memref<8x6xf32, #tpu.memory_space<vmem>>, vector<8x6xf32>,
    return
  }
}

</mosaic_0001>

<llo_original>
// kernel: tpu_custom_call.1
$region0: #{tpu_custom_call.1}
  #allocation0 [shape = 'u32[]', space=smem, size = 0x4, offset = 0x4, fixed_abs, tag = 'smem constant byte address 0x4 - core index']
  #allocation1 [shape = 'u32[144,128]{1,0:T(1,128)}', space=vmem, size = 0x12000, scoped, tag = 'internal scratch']
  #allocation2 [shape = 'f32[8,2048]{1,0:T(8,128)}', space=vmem, size = 0x10000, scoped, tag = 'scratch operand']
  %s0 = inlined_call_operand.vmem [shape: f32[8,48], index: 0, kind: input, shape index: {}]
  %s1 = inlined_call_operand.vmem [shape: f32[12,128], index: 1, kind: input, shape index: {}]
  %s2 = inlined_call_operand.vmem [shape: f32[3,128], index: 2, kind: input, shape index: {}]
  %s3 = inlined_call_operand.vmem [shape: f32[3,128], index: 3, kind: input, shape index: {}]
  %s4 = inlined_call_operand.vmem [shape: f32[3,128], index: 4, kind: input, shape index: {}]
  %s5 = inlined_call_operand.hbm [shape: f32[2048,128], index: 5, kind: input, shape index: {}]
  %s6 = inlined_call_operand.vmem [shape: f32[1,128], index: 6, kind: input, shape index: {}]
  %s7 = inlined_call_operand.vmem [shape: f32[128,6], index: 7, kind: input, shape index: {}]
  %s8 = inlined_call_operand.vmem [shape: f32[1,6], index: 8, kind: input, shape index: {}]
  %s9 = inlined_call_operand.hbm [shape: f32[8,6], index: 9, kind: output, shape index: {}]
  %s10 = sld [smem:[#allocation0]]
  $region50: #{tpu_custom_call.1} parent=0
    _
  %s12 = ssub.s32 1, %s10
  %s13 = scalar_select 0, %s12, %s10
  $region1: #{tpu_custom_call.1} parent=0
    #allocation3 [shape = 'u8[1048576]{0}', space=vmem, size = 0x100000, scoped, tag = 'input window, operand 5, single buffered']
    #allocation4 [shape = 's32[1]{0}', space=sflag, size = 0x4, scoped, tag = 'scoped memory for tpu_custom_call.1']
    #allocation5 [shape = 's32[1]{0}', space=sflag, size = 0x4, scoped, tag = 'scoped memory for tpu_custom_call.1']
    #allocation6 [shape = 'u8[4096]{0}', space=vmem, size = 0x1000, scoped, tag = 'output window, operand 0, single buffered']
    %14 = vsyncpa [#allocation4], 0
    %15 = vsyncpa [#allocation5], 0
    // Predicated region
    $region2: #{tpu_custom_call.1} parent=1 // pred_check
      _
    $region3: #{tpu_custom_call.1} parent=1 // pred_check_branch
      %17 = sbr.rel (0) target = $region5
    $region4: #{tpu_custom_call.1} parent=1 // pred_region
      _
    $region5: #{tpu_custom_call.1} parent=1 // pred_fallthru
      _
    // Predicated region
    $region6: #{tpu_custom_call.1} parent=1 // pred_check
      _
    $region7: #{tpu_custom_call.1} parent=1 // pred_check_branch
      %19 = sbr.rel (0) target = $region9
    $region8: #{tpu_custom_call.1} parent=1 // pred_region
      _
    $region9: #{tpu_custom_call.1} parent=1 // pred_fallthru
      _
    // Predicated region
    $region10: #{tpu_custom_call.1} parent=1 // pred_check
      _
    $region11: #{tpu_custom_call.1} parent=1 // pred_check_branch
      %21 = sbr.rel (0) target = $region13
    $region12: #{tpu_custom_call.1} parent=1 // pred_region
      _
    $region13: #{tpu_custom_call.1} parent=1 // pred_fallthru
      _
    // Predicated region
    $region14: #{tpu_custom_call.1} parent=1 // pred_check
      _
    $region15: #{tpu_custom_call.1} parent=1 // pred_check_branch
      %23 = sbr.rel (0) target = $region17
    $region16: #{tpu_custom_call.1} parent=1 // pred_region
      _
    $region17: #{tpu_custom_call.1} parent=1 // pred_fallthru
      _
    // Predicated region
    $region18: #{tpu_custom_call.1} parent=1 // pred_check
      _
    $region19: #{tpu_custom_call.1} parent=1 // pred_check_branch
      %25 = sbr.rel (0) target = $region21
    $region20: #{tpu_custom_call.1} parent=1 // pred_region
      _
    $region21: #{tpu_custom_call.1} parent=1 // pred_fallthru
      _
    // Predicated region
    $region22: #{tpu_custom_call.1} parent=1 // pred_check
      _
    $region23: #{tpu_custom_call.1} parent=1 // pred_check_branch
      %27 = sbr.rel (0) target = $region25
    $region24: #{tpu_custom_call.1} parent=1 // pred_region
      %s29 = ssub.s32 32768, 32768
      %30 = vsyncadd [#allocation4], %s29
      %s31 = sshll.u32 [#allocation3], 4
      %s32 = int_to_ptr.vmem [resolvable:$true] %s31
      %37 = dma.hbm_to_vmem [thread:$0]  %s5, 32768, %s32, [#allocation4], 128, 128, 8
    $region25: #{tpu_custom_call.1} parent=1 // pred_fallthru
      _
    // Predicated region
    $region26: #{tpu_custom_call.1} parent=1 // pred_check
      _
    $region27: #{tpu_custom_call.1} parent=1 // pred_check_branch
      %39 = sbr.rel (0) target = $region29
    $region28: #{tpu_custom_call.1} parent=1 // pred_region
      _
    $region29: #{tpu_custom_call.1} parent=1 // pred_fallthru
      _
    // Predicated region
    $region30: #{tpu_custom_call.1} parent=1 // pred_check
      _
    $region31: #{tpu_custom_call.1} parent=1 // pred_check_branch
      %41 = sbr.rel (0) target = $region33
    $region32: #{tpu_custom_call.1} parent=1 // pred_region
      _
    $region33: #{tpu_custom_call.1} parent=1 // pred_fallthru
      _
    // Predicated region
    $region34: #{tpu_custom_call.1} parent=1 // pred_check
      _
    $region35: #{tpu_custom_call.1} parent=1 // pred_check_branch
      %43 = sbr.rel (0) target = $region37
    $region36: #{tpu_custom_call.1} parent=1 // pred_region
      _
    $region37: #{tpu_custom_call.1} parent=1 // pred_fallthru
      _
    // Predicated region
    $region38: #{tpu_custom_call.1} parent=1 // pred_check
      _
    $region39: #{tpu_custom_call.1} parent=1 // pred_check_branch
      %45 = sbr.rel (0) target = $region41
    $region40: #{tpu_custom_call.1} parent=1 // pred_region
      %46 = dma.done [#allocation4], 32768
    $region41: #{tpu_custom_call.1} parent=1 // pred_fallthru
      _
    %v47 = vld [vmem:[%s0] sm:$0xff]
    %v48 = vld [vmem:[%s3] sm:$0x1]
    %v49 = vld [vmem:[%s4] sm:$0x1]
    %51 = vset.pattern.permute.xlu0 7
    %52 = vperm.xlu0 %51, %v47
    %v53 = vpop.permute.xlu0 %52
    %v55 = vlaneseq
    %v56 = vshrl.u32 %v55, 7
    %v57 = vsub.s32 0, %v56
    %v58 = vrot.slane %v48, %v57
    %v59 = vmul.f32 %v53, %v58
    %v60 = vlaneseq
    %v61 = vshrl.u32 %v60, 7
    %v62 = vsub.s32 0, %v61
    %v63 = vrot.slane %v49, %v62
    %v64 = vadd.f32 %v59, %v63
    %v65 = vmax.f32 %v64, 0.0
    %66 = vst [vmem:[#allocation2] sm:$0xff] %v65
    %v67 = vld [vmem:[%s3 + $0x1] sm:$0x1]
    %v68 = vld [vmem:[%s4 + $0x1] sm:$0x1]
    %69 = vset.pattern.permute.xlu0 15
    %70 = vperm.xlu0 %69, %v47
    %v71 = vpop.permute.xlu0 %70
    %v73 = vlaneseq
    %v74 = vshrl.u32 %v73, 7
    %v75 = vsub.s32 0, %v74
    %v76 = vrot.slane %v67, %v75
    %v77 = vmul.f32 %v71, %v76
    %v78 = vlaneseq
    %v79 = vshrl.u32 %v78, 7
    %v80 = vsub.s32 0, %v79
    %v81 = vrot.slane %v68, %v80
    %v82 = vadd.f32 %v77, %v81
    %v83 = vmax.f32 %v82, 0.0
    %84 = vst [vmem:[#allocation2 + $0x8] sm:$0xff] %v83
    %v85 = vld [vmem:[%s3 + $0x2] sm:$0x1]
    %v86 = vld [vmem:[%s4 + $0x2] sm:$0x1]
    %87 = vset.pattern.permute.xlu0 47
    %88 = vperm.xlu0 %87, %v47
    %v89 = vpop.permute.xlu0 %88
    %v91 = vlaneseq
    %v92 = vshrl.u32 %v91, 7
    %v93 = vsub.s32 0, %v92
    %v94 = vrot.slane %v85, %v93
    %v95 = vmul.f32 %v89, %v94
    %v96 = vlaneseq
    %v97 = vshrl.u32 %v96, 7
    %v98 = vsub.s32 0, %v97
    %v99 = vrot.slane %v86, %v98
    %v100 = vadd.f32 %v95, %v99
    %v101 = vmax.f32 %v100, 0.0
    %102 = vst [vmem:[#allocation2 + $0x78] sm:$0xff] %v101
    %103 = vset.pattern.permute.xlu0 16
    %104 = vperm.xlu0 %103, %v47
    %v105 = vpop.permute.xlu0 %104
    %107 = vset.pattern.permute.xlu0 17
    %108 = vperm.xlu0 %107, %v47
    %v109 = vpop.permute.xlu0 %108
    %111 = vset.pattern.permute.xlu0 18
    %112 = vperm.xlu0 %111, %v47
    %v113 = vpop.permute.xlu0 %112
    %115 = vset.pattern.permute.xlu0 19
    %116 = vperm.xlu0 %115, %v47
    %v117 = vpop.permute.xlu0 %116
    %119 = vset.pattern.permute.xlu0 20
    %120 = vperm.xlu0 %119, %v47
    %v121 = vpop.permute.xlu0 %120
    %123 = vset.pattern.permute.xlu0 21
    %124 = vperm.xlu0 %123, %v47
    %v125 = vpop.permute.xlu0 %124
    %127 = vset.pattern.permute.xlu0 22
    %128 = vperm.xlu0 %127, %v47
    %v129 = vpop.permute.xlu0 %128
    %131 = vset.pattern.permute.xlu0 23
    %132 = vperm.xlu0 %131, %v47
    %v133 = vpop.permute.xlu0 %132
    %v135 = vld [vmem:[%s1] sm:$0x1]
    %v136 = vld [vmem:[%s1 + $0x1] sm:$0x1]
    %v137 = vld [vmem:[%s1 + $0x2] sm:$0x1]
    %v138 = vld [vmem:[%s1 + $0x3] sm:$0x1]
    %v139 = vld [vmem:[%s2] sm:$0x1]
    %v140 = vlaneseq
    %v141 = vshrl.u32 %v140, 7
    %v142 = vsub.s32 0, %v141
    %v143 = vrot.slane %v135, %v142
    %v144 = vmul.f32 %v105, %v143
    %v145 = vlaneseq
    %v146 = vshrl.u32 %v145, 7
    %v147 = vsub.s32 0, %v146
    %v148 = vrot.slane %v139, %v147
    %v149 = vadd.f32 %v148, %v144
    %v150 = vlaneseq
    %v151 = vshrl.u32 %v150, 7
    %v152 = vsub.s32 0, %v151
    %v153 = vrot.slane %v136, %v152
    %v154 = vmul.f32 %v109, %v153
    %v155 = vadd.f32 %v149, %v154
    %v156 = vlaneseq
    %v157 = vshrl.u32 %v156, 7
    %v158 = vsub.s32 0, %v157
    %v159 = vrot.slane %v137, %v158
    %v160 = vmul.f32 %v113, %v159
    %v161 = vadd.f32 %v155, %v160
    %v162 = vlaneseq
    %v163 = vshrl.u32 %v162, 7
    %v164 = vsub.s32 0, %v163
    %v165 = vrot.slane %v138, %v164
    %v166 = vmul.f32 %v117, %v165
    %v167 = vadd.f32 %v161, %v166
    %v168 = vmax.f32 %v167, 0.0
    %169 = vst [vmem:[#allocation2 + $0x10] sm:$0xff] %v168
    %v170 = vmul.f32 %v109, %v143
    %v171 = vadd.f32 %v148, %v170
    %v172 = vmul.f32 %v113, %v153
    %v173 = vadd.f32 %v171, %v172
    %v174 = vmul.f32 %v117, %v159
    %v175 = vadd.f32 %v173, %v174
    %v176 = vmul.f32 %v121, %v165
    %v177 = vadd.f32 %v175, %v176
    %v178 = vmax.f32 %v177, 0.0
    %179 = vst [vmem:[#allocation2 + $0x18] sm:$0xff] %v178
    %v180 = vmul.f32 %v113, %v143
    %v181 = vadd.f32 %v148, %v180
    %v182 = vmul.f32 %v117, %v153
    %v183 = vadd.f32 %v181, %v182
    %v184 = vmul.f32 %v121, %v159
    %v185 = vadd.f32 %v183, %v184
    %v186 = vmul.f32 %v125, %v165
    %v187 = vadd.f32 %v185, %v186
    %v188 = vmax.f32 %v187, 0.0
    %189 = vst [vmem:[#allocation2 + $0x20] sm:$0xff] %v188
    %v190 = vmul.f32 %v117, %v143
    %v191 = vadd.f32 %v148, %v190
    %v192 = vmul.f32 %v121, %v153
    %v193 = vadd.f32 %v191, %v192
    %v194 = vmul.f32 %v125, %v159
    %v195 = vadd.f32 %v193, %v194
    %v196 = vmul.f32 %v129, %v165
    %v197 = vadd.f32 %v195, %v196
    %v198 = vmax.f32 %v197, 0.0
    %199 = vst [vmem:[#allocation2 + $0x28] sm:$0xff] %v198
    %v200 = vmul.f32 %v121, %v143
    %v201 = vadd.f32 %v148, %v200
    %v202 = vmul.f32 %v125, %v153
    %v203 = vadd.f32 %v201, %v202
    %v204 = vmul.f32 %v129, %v159
    %v205 = vadd.f32 %v203, %v204
    %v206 = vmul.f32 %v133, %v165
    %v207 = vadd.f32 %v205, %v206
    %v208 = vmax.f32 %v207, 0.0
    %209 = vst [vmem:[#allocation2 + $0x30] sm:$0xff] %v208
    %210 = vset.pattern.permute.xlu0 24
    %211 = vperm.xlu0 %210, %v47
    %v212 = vpop.permute.xlu0 %211
    %214 = vset.pattern.permute.xlu0 25
    %215 = vperm.xlu0 %214, %v47
    %v216 = vpop.permute.xlu0 %215
    %218 = vset.pattern.permute.xlu0 26
    %219 = vperm.xlu0 %218, %v47
    %v220 = vpop.permute.xlu0 %219
    %222 = vset.pattern.permute.xlu0 27
    %223 = vperm.xlu0 %222, %v47
    %v224 = vpop.permute.xlu0 %223
    %226 = vset.pattern.permute.xlu0 28
    %227 = vperm.xlu0 %226, %v47
    %v228 = vpop.permute.xlu0 %227
    %230 = vset.pattern.permute.xlu0 29
    %231 = vperm.xlu0 %230, %v47
    %v232 = vpop.permute.xlu0 %231
    %234 = vset.pattern.permute.xlu0 30
    %235 = vperm.xlu0 %234, %v47
    %v236 = vpop.permute.xlu0 %235
    %238 = vset.pattern.permute.xlu0 31
    %239 = vperm.xlu0 %238, %v47
    %v240 = vpop.permute.xlu0 %239
    %v242 = vld [vmem:[%s1 + $0x4] sm:$0x1]
    %v243 = vld [vmem:[%s1 + $0x5] sm:$0x1]
    %v244 = vld [vmem:[%s1 + $0x6] sm:$0x1]
    %v245 = vld [vmem:[%s1 + $0x7] sm:$0x1]
    %v246 = vld [vmem:[%s2 + $0x1] sm:$0x1]
    %v247 = vlaneseq
    %v248 = vshrl.u32 %v247, 7
    %v249 = vsub.s32 0, %v248
    %v250 = vrot.slane %v242, %v249
    %v251 = vmul.f32 %v212, %v250
    %v252 = vlaneseq
    %v253 = vshrl.u32 %v252, 7
    %v254 = vsub.s32 0, %v253
    %v255 = vrot.slane %v246, %v254
    %v256 = vadd.f32 %v255, %v251
    %v257 = vlaneseq
    %v258 = vshrl.u32 %v257, 7
    %v259 = vsub.s32 0, %v258
    %v260 = vrot.slane %v243, %v259
    %v261 = vmul.f32 %v216, %v260
    %v262 = vadd.f32 %v256, %v261
    %v263 = vlaneseq
    %v264 = vshrl.u32 %v263, 7
    %v265 = vsub.s32 0, %v264
    %v266 = vrot.slane %v244, %v265
    %v267 = vmul.f32 %v220, %v266
    %v268 = vadd.f32 %v262, %v267
    %v269 = vlaneseq
    %v270 = vshrl.u32 %v269, 7
    %v271 = vsub.s32 0, %v270
    %v272 = vrot.slane %v245, %v271
    %v273 = vmul.f32 %v224, %v272
    %v274 = vadd.f32 %v268, %v273
    %v275 = vmax.f32 %v274, 0.0
    %276 = vst [vmem:[#allocation2 + $0x38] sm:$0xff] %v275
    %v277 = vmul.f32 %v216, %v250
    %v278 = vadd.f32 %v255, %v277
    %v279 = vmul.f32 %v220, %v260
    %v280 = vadd.f32 %v278, %v279
    %v281 = vmul.f32 %v224, %v266
    %v282 = vadd.f32 %v280, %v281
    %v283 = vmul.f32 %v228, %v272
    %v284 = vadd.f32 %v282, %v283
    %v285 = vmax.f32 %v284, 0.0
    %286 = vst [vmem:[#allocation2 + $0x40] sm:$0xff] %v285
    %v287 = vmul.f32 %v220, %v250
    %v288 = vadd.f32 %v255, %v287
    %v289 = vmul.f32 %v224, %v260
    %v290 = vadd.f32 %v288, %v289
    %v291 = vmul.f32 %v228, %v266
    %v292 = vadd.f32 %v290, %v291
    %v293 = vmul.f32 %v232, %v272
    %v294 = vadd.f32 %v292, %v293
    %v295 = vmax.f32 %v294, 0.0
    %296 = vst [vmem:[#allocation2 + $0x48] sm:$0xff] %v295
    %v297 = vmul.f32 %v224, %v250
    %v298 = vadd.f32 %v255, %v297
    %v299 = vmul.f32 %v228, %v260
    %v300 = vadd.f32 %v298, %v299
    %v301 = vmul.f32 %v232, %v266
    %v302 = vadd.f32 %v300, %v301
    %v303 = vmul.f32 %v236, %v272
    %v304 = vadd.f32 %v302, %v303
    %v305 = vmax.f32 %v304, 0.0
    %306 = vst [vmem:[#allocation2 + $0x50] sm:$0xff] %v305
    %v307 = vmul.f32 %v228, %v250
    %v308 = vadd.f32 %v255, %v307
    %v309 = vmul.f32 %v232, %v260
    %v310 = vadd.f32 %v308, %v309
    %v311 = vmul.f32 %v236, %v266
    %v312 = vadd.f32 %v310, %v311
    %v313 = vmul.f32 %v240, %v272
    %v314 = vadd.f32 %v312, %v313
    %v315 = vmax.f32 %v314, 0.0
    %316 = vst [vmem:[#allocation2 + $0x58] sm:$0xff] %v315
    %317 = vset.pattern.permute.xlu0 32
    %318 = vperm.xlu0 %317, %v47
    %v319 = vpop.permute.xlu0 %318
    %321 = vset.pattern.permute.xlu0 33
    %322 = vperm.xlu0 %321, %v47
    %v323 = vpop.permute.xlu0 %322
    %325 = vset.pattern.permute.xlu0 34
    %326 = vperm.xlu0 %325, %v47
    %v327 = vpop.permute.xlu0 %326
    %329 = vset.pattern.permute.xlu0 35
    %330 = vperm.xlu0 %329, %v47
    %v331 = vpop.permute.xlu0 %330
    %333 = vset.pattern.permute.xlu0 36
    %334 = vperm.xlu0 %333, %v47
    %v335 = vpop.permute.xlu0 %334
    %337 = vset.pattern.permute.xlu0 37
    %338 = vperm.xlu0 %337, %v47
    %v339 = vpop.permute.xlu0 %338
    %v341 = vld [vmem:[%s1 + $0x8] sm:$0x1]
    %v342 = vld [vmem:[%s1 + $0x9] sm:$0x1]
    %v343 = vld [vmem:[%s1 + $0xa] sm:$0x1]
    %v344 = vld [vmem:[%s1 + $0xb] sm:$0x1]
    %v345 = vld [vmem:[%s2 + $0x2] sm:$0x1]
    %v346 = vlaneseq
    %v347 = vshrl.u32 %v346, 7
    %v348 = vsub.s32 0, %v347
    %v349 = vrot.slane %v341, %v348
    %v350 = vmul.f32 %v319, %v349
    %v351 = vlaneseq
    %v352 = vshrl.u32 %v351, 7
    %v353 = vsub.s32 0, %v352
    %v354 = vrot.slane %v345, %v353
    %v355 = vadd.f32 %v354, %v350
    %v356 = vlaneseq
    %v357 = vshrl.u32 %v356, 7
    %v358 = vsub.s32 0, %v357
    %v359 = vrot.slane %v342, %v358
    %v360 = vmul.f32 %v323, %v359
    %v361 = vadd.f32 %v355, %v360
    %v362 = vlaneseq
    %v363 = vshrl.u32 %v362, 7
    %v364 = vsub.s32 0, %v363
    %v365 = vrot.slane %v343, %v364
    %v366 = vmul.f32 %v327, %v365
    %v367 = vadd.f32 %v361, %v366
    %v368 = vlaneseq
    %v369 = vshrl.u32 %v368, 7
    %v370 = vsub.s32 0, %v369
    %v371 = vrot.slane %v344, %v370
    %v372 = vmul.f32 %v331, %v371
    %v373 = vadd.f32 %v367, %v372
    %v374 = vmax.f32 %v373, 0.0
    %375 = vst [vmem:[#allocation2 + $0x60] sm:$0xff] %v374
    %v376 = vmul.f32 %v323, %v349
    %v377 = vadd.f32 %v354, %v376
    %v378 = vmul.f32 %v327, %v359
    %v379 = vadd.f32 %v377, %v378
    %v380 = vmul.f32 %v331, %v365
    %v381 = vadd.f32 %v379, %v380
    %v382 = vmul.f32 %v335, %v371
    %v383 = vadd.f32 %v381, %v382
    %v384 = vmax.f32 %v383, 0.0
    %385 = vst [vmem:[#allocation2 + $0x68] sm:$0xff] %v384
    %v386 = vmul.f32 %v327, %v349
    %v387 = vadd.f32 %v354, %v386
    %v388 = vmul.f32 %v331, %v359
    %v389 = vadd.f32 %v387, %v388
    %v390 = vmul.f32 %v335, %v365
    %v391 = vadd.f32 %v389, %v390
    %v392 = vmul.f32 %v339, %v371
    %v393 = vadd.f32 %v391, %v392
    %v394 = vmax.f32 %v393, 0.0
    %395 = vst [vmem:[#allocation2 + $0x70] sm:$0xff] %v394
    %v396 = vld [vmem:[#allocation2] sm:$0xff]
    %v397 = vld [vmem:[#allocation2 + $0x8] sm:$0xff]
    %v398 = vld [vmem:[#allocation2 + $0x10] sm:$0xff]
    %v399 = vld [vmem:[#allocation2 + $0x18] sm:$0xff]
    %v400 = vld [vmem:[#allocation2 + $0x20] sm:$0xff]
    %v401 = vld [vmem:[#allocation2 + $0x28] sm:$0xff]
    %v402 = vld [vmem:[#allocation2 + $0x30] sm:$0xff]
    %v403 = vld [vmem:[#allocation2 + $0x38] sm:$0xff]
    %v404 = vld [vmem:[#allocation2 + $0x40] sm:$0xff]
    %v405 = vld [vmem:[#allocation2 + $0x48] sm:$0xff]
    %v406 = vld [vmem:[#allocation2 + $0x50] sm:$0xff]
    %v407 = vld [vmem:[#allocation2 + $0x58] sm:$0xff]
    %v408 = vld [vmem:[#allocation2 + $0x60] sm:$0xff]
    %v409 = vld [vmem:[#allocation2 + $0x68] sm:$0xff]
    %v410 = vld [vmem:[#allocation2 + $0x70] sm:$0xff]
    %v411 = vld [vmem:[#allocation2 + $0x78] sm:$0xff]
    %v412 = vld [vmem:[#allocation3] sm:$0xff]
    %v413 = vld [vmem:[#allocation3 + $0x8] sm:$0xff]
    %v414 = vld [vmem:[#allocation3 + $0x10] sm:$0xff]
    %v415 = vld [vmem:[#allocation3 + $0x18] sm:$0xff]
    %v416 = vld [vmem:[#allocation3 + $0x20] sm:$0xff]
    %v417 = vld [vmem:[#allocation3 + $0x28] sm:$0xff]
    %v418 = vld [vmem:[#allocation3 + $0x30] sm:$0xff]
    %v419 = vld [vmem:[#allocation3 + $0x38] sm:$0xff]
    %v420 = vld [vmem:[#allocation3 + $0x40] sm:$0xff]
    %v421 = vld [vmem:[#allocation3 + $0x48] sm:$0xff]
    %v422 = vld [vmem:[#allocation3 + $0x50] sm:$0xff]
    %v423 = vld [vmem:[#allocation3 + $0x58] sm:$0xff]
    %v424 = vld [vmem:[#allocation3 + $0x60] sm:$0xff]
    %v425 = vld [vmem:[#allocation3 + $0x68] sm:$0xff]
    %v426 = vld [vmem:[#allocation3 + $0x70] sm:$0xff]
    %v427 = vld [vmem:[#allocation3 + $0x78] sm:$0xff]
    %v428 = vld [vmem:[#allocation3 + $0x80] sm:$0xff]
    %v429 = vld [vmem:[#allocation3 + $0x88] sm:$0xff]
    %v430 = vld [vmem:[#allocation3 + $0x90] sm:$0xff]
    %v431 = vld [vmem:[#allocation3 + $0x98] sm:$0xff]
    %v432 = vld [vmem:[#allocation3 + $0xa0] sm:$0xff]
    %v433 = vld [vmem:[#allocation3 + $0xa8] sm:$0xff]
    %v434 = vld [vmem:[#allocation3 + $0xb0] sm:$0xff]
    %v435 = vld [vmem:[#allocation3 + $0xb8] sm:$0xff]
    %v436 = vld [vmem:[#allocation3 + $0xc0] sm:$0xff]
    %v437 = vld [vmem:[#allocation3 + $0xc8] sm:$0xff]
    %v438 = vld [vmem:[#allocation3 + $0xd0] sm:$0xff]
    %v439 = vld [vmem:[#allocation3 + $0xd8] sm:$0xff]
    %v440 = vld [vmem:[#allocation3 + $0xe0] sm:$0xff]
    %v441 = vld [vmem:[#allocation3 + $0xe8] sm:$0xff]
    %v442 = vld [vmem:[#allocation3 + $0xf0] sm:$0xff]
    %v443 = vld [vmem:[#allocation3 + $0xf8] sm:$0xff]
    %v444 = vld [vmem:[#allocation3 + $0x100] sm:$0xff]
    %v445 = vld [vmem:[#allocation3 + $0x108] sm:$0xff]
    %v446 = vld [vmem:[#allocation3 + $0x110] sm:$0xff]
    %v447 = vld [vmem:[#allocation3 + $0x118] sm:$0xff]
    %v448 = vld [vmem:[#allocation3 + $0x120] sm:$0xff]
    %v449 = vld [vmem:[#allocation3 + $0x128] sm:$0xff]
    %v450 = vld [vmem:[#allocation3 + $0x130] sm:$0xff]
    %v451 = vld [vmem:[#allocation3 + $0x138] sm:$0xff]
    %v452 = vld [vmem:[#allocation3 + $0x140] sm:$0xff]
    %v453 = vld [vmem:[#allocation3 + $0x148] sm:$0xff]
    %v454 = vld [vmem:[#allocation3 + $0x150] sm:$0xff]
    %v455 = vld [vmem:[#allocation3 + $0x158] sm:$0xff]
    %v456 = vld [vmem:[#allocation3 + $0x160] sm:$0xff]
    %v457 = vld [vmem:[#allocation3 + $0x168] sm:$0xff]
    %v458 = vld [vmem:[#allocation3 + $0x170] sm:$0xff]
    %v459 = vld [vmem:[#allocation3 + $0x178] sm:$0xff]
    %v460 = vld [vmem:[#allocation3 + $0x180] sm:$0xff]
    %v461 = vld [vmem:[#allocation3 + $0x188] sm:$0xff]
    %v462 = vld [vmem:[#allocation3 + $0x190] sm:$0xff]
    %v463 = vld [vmem:[#allocation3 + $0x198] sm:$0xff]
    %v464 = vld [vmem:[#allocation3 + $0x1a0] sm:$0xff]
    %v465 = vld [vmem:[#allocation3 + $0x1a8] sm:$0xff]
    %v466 = vld [vmem:[#allocation3 + $0x1b0] sm:$0xff]
    %v467 = vld [vmem:[#allocation3 + $0x1b8] sm:$0xff]
    %v468 = vld [vmem:[#allocation3 + $0x1c0] sm:$0xff]
    %v469 = vld [vmem:[#allocation3 + $0x1c8] sm:$0xff]
    %v470 = vld [vmem:[#allocation3 + $0x1d0] sm:$0xff]
    %v471 = vld [vmem:[#allocation3 + $0x1d8] sm:$0xff]
    %v472 = vld [vmem:[#allocation3 + $0x1e0] sm:$0xff]
    %v473 = vld [vmem:[#allocation3 + $0x1e8] sm:$0xff]
    %v474 = vld [vmem:[#allocation3 + $0x1f0] sm:$0xff]
    %v475 = vld [vmem:[#allocation3 + $0x1f8] sm:$0xff]
    %v476 = vld [vmem:[#allocation3 + $0x200] sm:$0xff]
    %v477 = vld [vmem:[#allocation3 + $0x208] sm:$0xff]
    %v478 = vld [vmem:[#allocation3 + $0x210] sm:$0xff]
    %v479 = vld [vmem:[#allocation3 + $0x218] sm:$0xff]
    %v480 = vld [vmem:[#allocation3 + $0x220] sm:$0xff]
    %v481 = vld [vmem:[#allocation3 + $0x228] sm:$0xff]
    %v482 = vld [vmem:[#allocation3 + $0x230] sm:$0xff]
    %v483 = vld [vmem:[#allocation3 + $0x238] sm:$0xff]
    %v484 = vld [vmem:[#allocation3 + $0x240] sm:$0xff]
    %v485 = vld [vmem:[#allocation3 + $0x248] sm:$0xff]
    %v486 = vld [vmem:[#allocation3 + $0x250] sm:$0xff]
    %v487 = vld [vmem:[#allocation3 + $0x258] sm:$0xff]
    %v488 = vld [vmem:[#allocation3 + $0x260] sm:$0xff]
    %v489 = vld [vmem:[#allocation3 + $0x268] sm:$0xff]
    %v490 = vld [vmem:[#allocation3 + $0x270] sm:$0xff]
    %v491 = vld [vmem:[#allocation3 + $0x278] sm:$0xff]
    %v492 = vld [vmem:[#allocation3 + $0x280] sm:$0xff]
    %v493 = vld [vmem:[#allocation3 + $0x288] sm:$0xff]
    %v494 = vld [vmem:[#allocation3 + $0x290] sm:$0xff]
    %v495 = vld [vmem:[#allocation3 + $0x298] sm:$0xff]
    %v496 = vld [vmem:[#allocation3 + $0x2a0] sm:$0xff]
    %v497 = vld [vmem:[#allocation3 + $0x2a8] sm:$0xff]
    %v498 = vld [vmem:[#allocation3 + $0x2b0] sm:$0xff]
    %v499 = vld [vmem:[#allocation3 + $0x2b8] sm:$0xff]
    %v500 = vld [vmem:[#allocation3 + $0x2c0] sm:$0xff]
    %v501 = vld [vmem:[#allocation3 + $0x2c8] sm:$0xff]
    %v502 = vld [vmem:[#allocation3 + $0x2d0] sm:$0xff]
    %v503 = vld [vmem:[#allocation3 + $0x2d8] sm:$0xff]
    %v504 = vld [vmem:[#allocation3 + $0x2e0] sm:$0xff]
    %v505 = vld [vmem:[#allocation3 + $0x2e8] sm:$0xff]
    %v506 = vld [vmem:[#allocation3 + $0x2f0] sm:$0xff]
    %v507 = vld [vmem:[#allocation3 + $0x2f8] sm:$0xff]
    %v508 = vld [vmem:[#allocation3 + $0x300] sm:$0xff]
    %v509 = vld [vmem:[#allocation3 + $0x308] sm:$0xff]
    %v510 = vld [vmem:[#allocation3 + $0x310] sm:$0xff]
    %v511 = vld [vmem:[#allocation3 + $0x318] sm:$0xff]
    %v512 = vld [vmem:[#allocation3 + $0x320] sm:$0xff]
    %v513 = vld [vmem:[#allocation3 + $0x328] sm:$0xff]
    %v514 = vld [vmem:[#allocation3 + $0x330] sm:$0xff]
    %v515 = vld [vmem:[#allocation3 + $0x338] sm:$0xff]
    %v516 = vld [vmem:[#allocation3 + $0x340] sm:$0xff]
    %v517 = vld [vmem:[#allocation3 + $0x348] sm:$0xff]
    %v518 = vld [vmem:[#allocation3 + $0x350] sm:$0xff]
    %v519 = vld [vmem:[#allocation3 + $0x358] sm:$0xff]
    %v520 = vld [vmem:[#allocation3 + $0x360] sm:$0xff]
    %v521 = vld [vmem:[#allocation3 + $0x368] sm:$0xff]
    %v522 = vld [vmem:[#allocation3 + $0x370] sm:$0xff]
    %v523 = vld [vmem:[#allocation3 + $0x378] sm:$0xff]
    %v524 = vld [vmem:[#allocation3 + $0x380] sm:$0xff]
    %v525 = vld [vmem:[#allocation3 + $0x388] sm:$0xff]
    %v526 = vld [vmem:[#allocation3 + $0x390] sm:$0xff]
    %v527 = vld [vmem:[#allocation3 + $0x398] sm:$0xff]
    %v528 = vld [vmem:[#allocation3 + $0x3a0] sm:$0xff]
    %v529 = vld [vmem:[#allocation3 + $0x3a8] sm:$0xff]
    %v530 = vld [vmem:[#allocation3 + $0x3b0] sm:$0xff]
    %v531 = vld [vmem:[#allocation3 + $0x3b8] sm:$0xff]
    %v532 = vld [vmem:[#allocation3 + $0x3c0] sm:$0xff]
    %v533 = vld [vmem:[#allocation3 + $0x3c8] sm:$0xff]
    %v534 = vld [vmem:[#allocation3 + $0x3d0] sm:$0xff]
    %v535 = vld [vmem:[#allocation3 + $0x3d8] sm:$0xff]
    %v536 = vld [vmem:[#allocation3 + $0x3e0] sm:$0xff]
    %v537 = vld [vmem:[#allocation3 + $0x3e8] sm:$0xff]
    %v538 = vld [vmem:[#allocation3 + $0x3f0] sm:$0xff]
    %v539 = vld [vmem:[#allocation3 + $0x3f8] sm:$0xff]
    %v540 = vld [vmem:[#allocation3 + $0x400] sm:$0xff]
    %v541 = vld [vmem:[#allocation3 + $0x408] sm:$0xff]
    %v542 = vld [vmem:[#allocation3 + $0x410] sm:$0xff]
    %v543 = vld [vmem:[#allocation3 + $0x418] sm:$0xff]
    %v544 = vld [vmem:[#allocation3 + $0x420] sm:$0xff]
    %v545 = vld [vmem:[#allocation3 + $0x428] sm:$0xff]
    %v546 = vld [vmem:[#allocation3 + $0x430] sm:$0xff]
    %v547 = vld [vmem:[#allocation3 + $0x438] sm:$0xff]
    %v548 = vld [vmem:[#allocation3 + $0x440] sm:$0xff]
    %v549 = vld [vmem:[#allocation3 + $0x448] sm:$0xff]
    %v550 = vld [vmem:[#allocation3 + $0x450] sm:$0xff]
    %v551 = vld [vmem:[#allocation3 + $0x458] sm:$0xff]
    %v552 = vld [vmem:[#allocation3 + $0x460] sm:$0xff]
    %v553 = vld [vmem:[#allocation3 + $0x468] sm:$0xff]
    %v554 = vld [vmem:[#allocation3 + $0x470] sm:$0xff]
    %v555 = vld [vmem:[#allocation3 + $0x478] sm:$0xff]
    %v556 = vld [vmem:[#allocation3 + $0x480] sm:$0xff]
    %v557 = vld [vmem:[#allocation3 + $0x488] sm:$0xff]
    %v558 = vld [vmem:[#allocation3 + $0x490] sm:$0xff]
    %v559 = vld [vmem:[#allocation3 + $0x498] sm:$0xff]
    %v560 = vld [vmem:[#allocation3 + $0x4a0] sm:$0xff]
    %v561 = vld [vmem:[#allocation3 + $0x4a8] sm:$0xff]
    %v562 = vld [vmem:[#allocation3 + $0x4b0] sm:$0xff]
    %v563 = vld [vmem:[#allocation3 + $0x4b8] sm:$0xff]
    %v564 = vld [vmem:[#allocation3 + $0x4c0] sm:$0xff]
    %v565 = vld [vmem:[#allocation3 + $0x4c8] sm:$0xff]
    %v566 = vld [vmem:[#allocation3 + $0x4d0] sm:$0xff]
    %v567 = vld [vmem:[#allocation3 + $0x4d8] sm:$0xff]
    %v568 = vld [vmem:[#allocation3 + $0x4e0] sm:$0xff]
    %v569 = vld [vmem:[#allocation3 + $0x4e8] sm:$0xff]
    %v570 = vld [vmem:[#allocation3 + $0x4f0] sm:$0xff]
    %v571 = vld [vmem:[#allocation3 + $0x4f8] sm:$0xff]
    %v572 = vld [vmem:[#allocation3 + $0x500] sm:$0xff]
    %v573 = vld [vmem:[#allocation3 + $0x508] sm:$0xff]
    %v574 = vld [vmem:[#allocation3 + $0x510] sm:$0xff]
    %v575 = vld [vmem:[#allocation3 + $0x518] sm:$0xff]
    %v576 = vld [vmem:[#allocation3 + $0x520] sm:$0xff]
    %v577 = vld [vmem:[#allocation3 + $0x528] sm:$0xff]
    %v578 = vld [vmem:[#allocation3 + $0x530] sm:$0xff]
    %v579 = vld [vmem:[#allocation3 + $0x538] sm:$0xff]
    %v580 = vld [vmem:[#allocation3 + $0x540] sm:$0xff]
    %v581 = vld [vmem:[#allocation3 + $0x548] sm:$0xff]
    %v582 = vld [vmem:[#allocation3 + $0x550] sm:$0xff]
    %v583 = vld [vmem:[#allocation3 + $0x558] sm:$0xff]
    %v584 = vld [vmem:[#allocation3 + $0x560] sm:$0xff]
    %v585 = vld [vmem:[#allocation3 + $0x568] sm:$0xff]
    %v586 = vld [vmem:[#allocation3 + $0x570] sm:$0xff]
    %v587 = vld [vmem:[#allocation3 + $0x578] sm:$0xff]
    %v588 = vld [vmem:[#allocation3 + $0x580] sm:$0xff]
    %v589 = vld [vmem:[#allocation3 + $0x588] sm:$0xff]
    %v590 = vld [vmem:[#allocation3 + $0x590] sm:$0xff]
    %v591 = vld [vmem:[#allocation3 + $0x598] sm:$0xff]
    %v592 = vld [vmem:[#allocation3 + $0x5a0] sm:$0xff]
    %v593 = vld [vmem:[#allocation3 + $0x5a8] sm:$0xff]
    %v594 = vld [vmem:[#allocation3 + $0x5b0] sm:$0xff]
    %v595 = vld [vmem:[#allocation3 + $0x5b8] sm:$0xff]
    %v596 = vld [vmem:[#allocation3 + $0x5c0] sm:$0xff]
    %v597 = vld [vmem:[#allocation3 + $0x5c8] sm:$0xff]
    %v598 = vld [vmem:[#allocation3 + $0x5d0] sm:$0xff]
    %v599 = vld [vmem:[#allocation3 + $0x5d8] sm:$0xff]
    %v600 = vld [vmem:[#allocation3 + $0x5e0] sm:$0xff]
    %v601 = vld [vmem:[#allocation3 + $0x5e8] sm:$0xff]
    %v602 = vld [vmem:[#allocation3 + $0x5f0] sm:$0xff]
    %v603 = vld [vmem:[#allocation3 + $0x5f8] sm:$0xff]
    %v604 = vld [vmem:[#allocation3 + $0x600] sm:$0xff]
    %v605 = vld [vmem:[#allocation3 + $0x608] sm:$0xff]
    %v606 = vld [vmem:[#allocation3 + $0x610] sm:$0xff]
    %v607 = vld [vmem:[#allocation3 + $0x618] sm:$0xff]
    %v608 = vld [vmem:[#allocation3 + $0x620] sm:$0xff]
    %v609 = vld [vmem:[#allocation3 + $0x628] sm:$0xff]
    %v610 = vld [vmem:[#allocation3 + $0x630] sm:$0xff]
    %v611 = vld [vmem:[#allocation3 + $0x638] sm:$0xff]
    %v612 = vld [vmem:[#allocation3 + $0x640] sm:$0xff]
    %v613 = vld [vmem:[#allocation3 + $0x648] sm:$0xff]
    %v614 = vld [vmem:[#allocation3 + $0x650] sm:$0xff]
    %v615 = vld [vmem:[#allocation3 + $0x658] sm:$0xff]
    %v616 = vld [vmem:[#allocation3 + $0x660] sm:$0xff]
    %v617 = vld [vmem:[#allocation3 + $0x668] sm:$0xff]
    %v618 = vld [vmem:[#allocation3 + $0x670] sm:$0xff]
    %v619 = vld [vmem:[#allocation3 + $0x678] sm:$0xff]
    %v620 = vld [vmem:[#allocation3 + $0x680] sm:$0xff]
    %v621 = vld [vmem:[#allocation3 + $0x688] sm:$0xff]
    %v622 = vld [vmem:[#allocation3 + $0x690] sm:$0xff]
    %v623 = vld [vmem:[#allocation3 + $0x698] sm:$0xff]
    %v624 = vld [vmem:[#allocation3 + $0x6a0] sm:$0xff]
    %v625 = vld [vmem:[#allocation3 + $0x6a8] sm:$0xff]
    %v626 = vld [vmem:[#allocation3 + $0x6b0] sm:$0xff]
    %v627 = vld [vmem:[#allocation3 + $0x6b8] sm:$0xff]
    %v628 = vld [vmem:[#allocation3 + $0x6c0] sm:$0xff]
    %v629 = vld [vmem:[#allocation3 + $0x6c8] sm:$0xff]
    %v630 = vld [vmem:[#allocation3 + $0x6d0] sm:$0xff]
    %v631 = vld [vmem:[#allocation3 + $0x6d8] sm:$0xff]
    %v632 = vld [vmem:[#allocation3 + $0x6e0] sm:$0xff]
    %v633 = vld [vmem:[#allocation3 + $0x6e8] sm:$0xff]
    %v634 = vld [vmem:[#allocation3 + $0x6f0] sm:$0xff]
    %v635 = vld [vmem:[#allocation3 + $0x6f8] sm:$0xff]
    %v636 = vld [vmem:[#allocation3 + $0x700] sm:$0xff]
    %v637 = vld [vmem:[#allocation3 + $0x708] sm:$0xff]
    %v638 = vld [vmem:[#allocation3 + $0x710] sm:$0xff]
    %v639 = vld [vmem:[#allocation3 + $0x718] sm:$0xff]
    %v640 = vld [vmem:[#allocation3 + $0x720] sm:$0xff]
    %v641 = vld [vmem:[#allocation3 + $0x728] sm:$0xff]
    %v642 = vld [vmem:[#allocation3 + $0x730] sm:$0xff]
    %v643 = vld [vmem:[#allocation3 + $0x738] sm:$0xff]
    %v644 = vld [vmem:[#allocation3 + $0x740] sm:$0xff]
    %v645 = vld [vmem:[#allocation3 + $0x748] sm:$0xff]
    %v646 = vld [vmem:[#allocation3 + $0x750] sm:$0xff]
    %v647 = vld [vmem:[#allocation3 + $0x758] sm:$0xff]
    %v648 = vld [vmem:[#allocation3 + $0x760] sm:$0xff]
    %v649 = vld [vmem:[#allocation3 + $0x768] sm:$0xff]
    %v650 = vld [vmem:[#allocation3 + $0x770] sm:$0xff]
    %v651 = vld [vmem:[#allocation3 + $0x778] sm:$0xff]
    %v652 = vld [vmem:[#allocation3 + $0x780] sm:$0xff]
    %v653 = vld [vmem:[#allocation3 + $0x788] sm:$0xff]
    %v654 = vld [vmem:[#allocation3 + $0x790] sm:$0xff]
    %v655 = vld [vmem:[#allocation3 + $0x798] sm:$0xff]
    %v656 = vld [vmem:[#allocation3 + $0x7a0] sm:$0xff]
    %v657 = vld [vmem:[#allocation3 + $0x7a8] sm:$0xff]
    %v658 = vld [vmem:[#allocation3 + $0x7b0] sm:$0xff]
    %v659 = vld [vmem:[#allocation3 + $0x7b8] sm:$0xff]
    %v660 = vld [vmem:[#allocation3 + $0x7c0] sm:$0xff]
    %v661 = vld [vmem:[#allocation3 + $0x7c8] sm:$0xff]
    %v662 = vld [vmem:[#allocation3 + $0x7d0] sm:$0xff]
    %v663 = vld [vmem:[#allocation3 + $0x7d8] sm:$0xff]
    %v664 = vld [vmem:[#allocation3 + $0x7e0] sm:$0xff]
    %v665 = vld [vmem:[#allocation3 + $0x7e8] sm:$0xff]
    %v666 = vld [vmem:[#allocation3 + $0x7f0] sm:$0xff]
    %v667 = vld [vmem:[#allocation3 + $0x7f8] sm:$0xff]
    %v668 = vld [vmem:[%s6] sm:$0x1]
    %v670 = vlaneseq
    %v671 = vshrl.u32 %v670, 7
    %v672 = vsub.s32 0, %v671
    %v673 = vrot.slane %v668, %v672
    %675 = vmatprep.subr.mxu0 0.0
    %676 = vmatpush1.msra.mxu0 %v427
    %677 = vmatprep.subr.mxu0 0.0
    %678 = vmatpush1.msra.mxu0 %v426
    %679 = vmatprep.subr.mxu0 0.0
    %680 = vmatpush1.msra.mxu0 %v425
    %681 = vmatprep.subr.mxu0 0.0
    %682 = vmatpush1.msra.mxu0 %v424
    %683 = vmatprep.subr.mxu0 0.0
    %684 = vmatpush1.msra.mxu0 %v423
    %685 = vmatprep.subr.mxu0 0.0
    %686 = vmatpush1.msra.mxu0 %v422
    %687 = vmatprep.subr.mxu0 0.0
    %688 = vmatpush1.msra.mxu0 %v421
    %689 = vmatprep.subr.mxu0 0.0
    %690 = vmatpush1.msra.mxu0 %v420
    %691 = vmatprep.subr.mxu0 0.0
    %692 = vmatpush1.msra.mxu0 %v419
    %693 = vmatprep.subr.mxu0 0.0
    %694 = vmatpush1.msra.mxu0 %v418
    %695 = vmatprep.subr.mxu0 0.0
    %696 = vmatpush1.msra.mxu0 %v417
    %697 = vmatprep.subr.mxu0 0.0
    %698 = vmatpush1.msra.mxu0 %v416
    %699 = vmatprep.subr.mxu0 0.0
    %700 = vmatpush1.msra.mxu0 %v415
    %701 = vmatprep.subr.mxu0 0.0
    %702 = vmatpush1.msra.mxu0 %v414
    %703 = vmatprep.subr.mxu0 0.0
    %704 = vmatpush1.msra.mxu0 %v413
    %705 = vmatprep.subr.mxu0 0.0
    %706 = vmatpush1.msra.mxu0 %v412
    %707 = vmatprep.subr.mxu0 0.0
    %708 = vmatpush2.msra.mxu0 %v443
    %709 = vmatprep.subr.mxu0 0.0
    %710 = vmatpush2.msra.mxu0 %v442
    %711 = vmatprep.subr.mxu0 0.0
    %712 = vmatpush2.msra.mxu0 %v441
    %713 = vmatprep.subr.mxu0 0.0
    %714 = vmatpush2.msra.mxu0 %v440
    %715 = vmatprep.subr.mxu0 0.0
    %716 = vmatpush2.msra.mxu0 %v439
    %717 = vmatprep.subr.mxu0 0.0
    %718 = vmatpush2.msra.mxu0 %v438
    %719 = vmatprep.subr.mxu0 0.0
    %720 = vmatpush2.msra.mxu0 %v437
    %721 = vmatprep.subr.mxu0 0.0
    %722 = vmatpush2.msra.mxu0 %v436
    %723 = vmatprep.subr.mxu0 0.0
    %724 = vmatpush2.msra.mxu0 %v435
    %725 = vmatprep.subr.mxu0 0.0
    %726 = vmatpush2.msra.mxu0 %v434
    %727 = vmatprep.subr.mxu0 0.0
    %728 = vmatpush2.msra.mxu0 %v433
    %729 = vmatprep.subr.mxu0 0.0
    %730 = vmatpush2.msra.mxu0 %v432
    %731 = vmatprep.subr.mxu0 0.0
    %732 = vmatpush2.msra.mxu0 %v431
    %733 = vmatprep.subr.mxu0 0.0
    %734 = vmatpush2.msra.mxu0 %v430
    %735 = vmatprep.subr.mxu0 0.0
    %736 = vmatpush2.msra.mxu0 %v429
    %737 = vmatprep.subr.mxu0 0.0
    %738 = vmatpush2.msra.mxu0 %v428
    %739 = vmatprep.mubr.f32.mxu0 %v397
    %740 = vmatmul.mubr.f32.gmra.mxu0 %v396
    %v741 = vpop.f32.mrf.mxu0
    %v742 = vadd.f32 %v673, %v741
    %v743 = vpop.f32.mrf.mxu0
    %744 = vdwg.mxu0
    %745 = vmatprep.subr.mxu0 0.0
    %746 = vmatpush1.msra.mxu0 %v459
    %747 = vmatprep.subr.mxu0 0.0
    %748 = vmatpush1.msra.mxu0 %v458
    %749 = vmatprep.subr.mxu0 0.0
    %750 = vmatpush1.msra.mxu0 %v457
    %751 = vmatprep.subr.mxu0 0.0
    %752 = vmatpush1.msra.mxu0 %v456
    %753 = vmatprep.subr.mxu0 0.0
    %754 = vmatpush1.msra.mxu0 %v455
    %755 = vmatprep.subr.mxu0 0.0
    %756 = vmatpush1.msra.mxu0 %v454
    %757 = vmatprep.subr.mxu0 0.0
    %758 = vmatpush1.msra.mxu0 %v453
    %759 = vmatprep.subr.mxu0 0.0
    %760 = vmatpush1.msra.mxu0 %v452
    %761 = vmatprep.subr.mxu0 0.0
    %762 = vmatpush1.msra.mxu0 %v451
    %763 = vmatprep.subr.mxu0 0.0
    %764 = vmatpush1.msra.mxu0 %v450
    %765 = vmatprep.subr.mxu0 0.0
    %766 = vmatpush1.msra.mxu0 %v449
    %767 = vmatprep.subr.mxu0 0.0
    %768 = vmatpush1.msra.mxu0 %v448
    %769 = vmatprep.subr.mxu0 0.0
    %770 = vmatpush1.msra.mxu0 %v447
    %771 = vmatprep.subr.mxu0 0.0
    %772 = vmatpush1.msra.mxu0 %v446
    %773 = vmatprep.subr.mxu0 0.0
    %774 = vmatpush1.msra.mxu0 %v445
    %775 = vmatprep.subr.mxu0 0.0
    %776 = vmatpush1.msra.mxu0 %v444
    %777 = vmatprep.subr.mxu0 0.0
    %778 = vmatpush2.msra.mxu0 %v475
    %779 = vmatprep.subr.mxu0 0.0
    %780 = vmatpush2.msra.mxu0 %v474
    %781 = vmatprep.subr.mxu0 0.0
    %782 = vmatpush2.msra.mxu0 %v473
    %783 = vmatprep.subr.mxu0 0.0
    %784 = vmatpush2.msra.mxu0 %v472
    %785 = vmatprep.subr.mxu0 0.0
    %786 = vmatpush2.msra.mxu0 %v471
    %787 = vmatprep.subr.mxu0 0.0
    %788 = vmatpush2.msra.mxu0 %v470
    %789 = vmatprep.subr.mxu0 0.0
    %790 = vmatpush2.msra.mxu0 %v469
    %791 = vmatprep.subr.mxu0 0.0
    %792 = vmatpush2.msra.mxu0 %v468
    %793 = vmatprep.subr.mxu0 0.0
    %794 = vmatpush2.msra.mxu0 %v467
    %795 = vmatprep.subr.mxu0 0.0
    %796 = vmatpush2.msra.mxu0 %v466
    %797 = vmatprep.subr.mxu0 0.0
    %798 = vmatpush2.msra.mxu0 %v465
    %799 = vmatprep.subr.mxu0 0.0
    %800 = vmatpush2.msra.mxu0 %v464
    %801 = vmatprep.subr.mxu0 0.0
    %802 = vmatpush2.msra.mxu0 %v463
    %803 = vmatprep.subr.mxu0 0.0
    %804 = vmatpush2.msra.mxu0 %v462
    %805 = vmatprep.subr.mxu0 0.0
    %806 = vmatpush2.msra.mxu0 %v461
    %807 = vmatprep.subr.mxu0 0.0
    %808 = vmatpush2.msra.mxu0 %v460
    %809 = vmatprep.mubr.f32.mxu0 %v399
    %810 = vmatmul.mubr.f32.gmra.mxu0 %v398
    %v811 = vpop.f32.mrf.mxu0
    %v812 = vadd.f32 %v742, %v811
    %v813 = vpop.f32.mrf.mxu0
    %814 = vdwg.mxu0
    %815 = vmatprep.subr.mxu0 0.0
    %816 = vmatpush1.msra.mxu0 %v491
    %817 = vmatprep.subr.mxu0 0.0
    %818 = vmatpush1.msra.mxu0 %v490
    %819 = vmatprep.subr.mxu0 0.0
    %820 = vmatpush1.msra.mxu0 %v489
    %821 = vmatprep.subr.mxu0 0.0
    %822 = vmatpush1.msra.mxu0 %v488
    %823 = vmatprep.subr.mxu0 0.0
    %824 = vmatpush1.msra.mxu0 %v487
    %825 = vmatprep.subr.mxu0 0.0
    %826 = vmatpush1.msra.mxu0 %v486
    %827 = vmatprep.subr.mxu0 0.0
    %828 = vmatpush1.msra.mxu0 %v485
    %829 = vmatprep.subr.mxu0 0.0
    %830 = vmatpush1.msra.mxu0 %v484
    %831 = vmatprep.subr.mxu0 0.0
    %832 = vmatpush1.msra.mxu0 %v483
    %833 = vmatprep.subr.mxu0 0.0
    %834 = vmatpush1.msra.mxu0 %v482
    %835 = vmatprep.subr.mxu0 0.0
    %836 = vmatpush1.msra.mxu0 %v481
    %837 = vmatprep.subr.mxu0 0.0
    %838 = vmatpush1.msra.mxu0 %v480
    %839 = vmatprep.subr.mxu0 0.0
    %840 = vmatpush1.msra.mxu0 %v479
    %841 = vmatprep.subr.mxu0 0.0
    %842 = vmatpush1.msra.mxu0 %v478
    %843 = vmatprep.subr.mxu0 0.0
    %844 = vmatpush1.msra.mxu0 %v477
    %845 = vmatprep.subr.mxu0 0.0
    %846 = vmatpush1.msra.mxu0 %v476
    %847 = vmatprep.subr.mxu0 0.0
    %848 = vmatpush2.msra.mxu0 %v507
    %849 = vmatprep.subr.mxu0 0.0
    %850 = vmatpush2.msra.mxu0 %v506
    %851 = vmatprep.subr.mxu0 0.0
    %852 = vmatpush2.msra.mxu0 %v505
    %853 = vmatprep.subr.mxu0 0.0
    %854 = vmatpush2.msra.mxu0 %v504
    %855 = vmatprep.subr.mxu0 0.0
    %856 = vmatpush2.msra.mxu0 %v503
    %857 = vmatprep.subr.mxu0 0.0
    %858 = vmatpush2.msra.mxu0 %v502
    %859 = vmatprep.subr.mxu0 0.0
    %860 = vmatpush2.msra.mxu0 %v501
    %861 = vmatprep.subr.mxu0 0.0
    %862 = vmatpush2.msra.mxu0 %v500
    %863 = vmatprep.subr.mxu0 0.0
    %864 = vmatpush2.msra.mxu0 %v499
    %865 = vmatprep.subr.mxu0 0.0
    %866 = vmatpush2.msra.mxu0 %v498
    %867 = vmatprep.subr.mxu0 0.0
    %868 = vmatpush2.msra.mxu0 %v497
    %869 = vmatprep.subr.mxu0 0.0
    %870 = vmatpush2.msra.mxu0 %v496
    %871 = vmatprep.subr.mxu0 0.0
    %872 = vmatpush2.msra.mxu0 %v495
    %873 = vmatprep.subr.mxu0 0.0
    %874 = vmatpush2.msra.mxu0 %v494
    %875 = vmatprep.subr.mxu0 0.0
    %876 = vmatpush2.msra.mxu0 %v493
    %877 = vmatprep.subr.mxu0 0.0
    %878 = vmatpush2.msra.mxu0 %v492
    %879 = vmatprep.mubr.f32.mxu0 %v401
    %880 = vmatmul.mubr.f32.gmra.mxu0 %v400
    %v881 = vpop.f32.mrf.mxu0
    %v882 = vadd.f32 %v812, %v881
    %v883 = vpop.f32.mrf.mxu0
    %884 = vdwg.mxu0
    %885 = vmatprep.subr.mxu0 0.0
    %886 = vmatpush1.msra.mxu0 %v523
    %887 = vmatprep.subr.mxu0 0.0
    %888 = vmatpush1.msra.mxu0 %v522
    %889 = vmatprep.subr.mxu0 0.0
    %890 = vmatpush1.msra.mxu0 %v521
    %891 = vmatprep.subr.mxu0 0.0
    %892 = vmatpush1.msra.mxu0 %v520
    %893 = vmatprep.subr.mxu0 0.0
    %894 = vmatpush1.msra.mxu0 %v519
    %895 = vmatprep.subr.mxu0 0.0
    %896 = vmatpush1.msra.mxu0 %v518
    %897 = vmatprep.subr.mxu0 0.0
    %898 = vmatpush1.msra.mxu0 %v517
    %899 = vmatprep.subr.mxu0 0.0
    %900 = vmatpush1.msra.mxu0 %v516
    %901 = vmatprep.subr.mxu0 0.0
    %902 = vmatpush1.msra.mxu0 %v515
    %903 = vmatprep.subr.mxu0 0.0
    %904 = vmatpush1.msra.mxu0 %v514
    %905 = vmatprep.subr.mxu0 0.0
    %906 = vmatpush1.msra.mxu0 %v513
    %907 = vmatprep.subr.mxu0 0.0
    %908 = vmatpush1.msra.mxu0 %v512
    %909 = vmatprep.subr.mxu0 0.0
    %910 = vmatpush1.msra.mxu0 %v511
    %911 = vmatprep.subr.mxu0 0.0
    %912 = vmatpush1.msra.mxu0 %v510
    %913 = vmatprep.subr.mxu0 0.0
    %914 = vmatpush1.msra.mxu0 %v509
    %915 = vmatprep.subr.mxu0 0.0
    %916 = vmatpush1.msra.mxu0 %v508
    %917 = vmatprep.subr.mxu0 0.0
    %918 = vmatpush2.msra.mxu0 %v539
    %919 = vmatprep.subr.mxu0 0.0
    %920 = vmatpush2.msra.mxu0 %v538
    %921 = vmatprep.subr.mxu0 0.0
    %922 = vmatpush2.msra.mxu0 %v537
    %923 = vmatprep.subr.mxu0 0.0
    %924 = vmatpush2.msra.mxu0 %v536
    %925 = vmatprep.subr.mxu0 0.0
    %926 = vmatpush2.msra.mxu0 %v535
    %927 = vmatprep.subr.mxu0 0.0
    %928 = vmatpush2.msra.mxu0 %v534
    %929 = vmatprep.subr.mxu0 0.0
    %930 = vmatpush2.msra.mxu0 %v533
    %931 = vmatprep.subr.mxu0 0.0
    %932 = vmatpush2.msra.mxu0 %v532
    %933 = vmatprep.subr.mxu0 0.0
    %934 = vmatpush2.msra.mxu0 %v531
    %935 = vmatprep.subr.mxu0 0.0
    %936 = vmatpush2.msra.mxu0 %v530
    %937 = vmatprep.subr.mxu0 0.0
    %938 = vmatpush2.msra.mxu0 %v529
    %939 = vmatprep.subr.mxu0 0.0
    %940 = vmatpush2.msra.mxu0 %v528
    %941 = vmatprep.subr.mxu0 0.0
    %942 = vmatpush2.msra.mxu0 %v527
    %943 = vmatprep.subr.mxu0 0.0
    %944 = vmatpush2.msra.mxu0 %v526
    %945 = vmatprep.subr.mxu0 0.0
    %946 = vmatpush2.msra.mxu0 %v525
    %947 = vmatprep.subr.mxu0 0.0
    %948 = vmatpush2.msra.mxu0 %v524
    %949 = vmatprep.mubr.f32.mxu0 %v403
    %950 = vmatmul.mubr.f32.gmra.mxu0 %v402
    %v951 = vpop.f32.mrf.mxu0
    %v952 = vadd.f32 %v882, %v951
    %v953 = vpop.f32.mrf.mxu0
    %954 = vdwg.mxu0
    %955 = vmatprep.subr.mxu0 0.0
    %956 = vmatpush1.msra.mxu0 %v555
    %957 = vmatprep.subr.mxu0 0.0
    %958 = vmatpush1.msra.mxu0 %v554
    %959 = vmatprep.subr.mxu0 0.0
    %960 = vmatpush1.msra.mxu0 %v553
    %961 = vmatprep.subr.mxu0 0.0
    %962 = vmatpush1.msra.mxu0 %v552
    %963 = vmatprep.subr.mxu0 0.0
    %964 = vmatpush1.msra.mxu0 %v551
    %965 = vmatprep.subr.mxu0 0.0
    %966 = vmatpush1.msra.mxu0 %v550
    %967 = vmatprep.subr.mxu0 0.0
    %968 = vmatpush1.msra.mxu0 %v549
    %969 = vmatprep.subr.mxu0 0.0
    %970 = vmatpush1.msra.mxu0 %v548
    %971 = vmatprep.subr.mxu0 0.0
    %972 = vmatpush1.msra.mxu0 %v547
    %973 = vmatprep.subr.mxu0 0.0
    %974 = vmatpush1.msra.mxu0 %v546
    %975 = vmatprep.subr.mxu0 0.0
    %976 = vmatpush1.msra.mxu0 %v545
    %977 = vmatprep.subr.mxu0 0.0
    %978 = vmatpush1.msra.mxu0 %v544
    %979 = vmatprep.subr.mxu0 0.0
    %980 = vmatpush1.msra.mxu0 %v543
    %981 = vmatprep.subr.mxu0 0.0
    %982 = vmatpush1.msra.mxu0 %v542
    %983 = vmatprep.subr.mxu0 0.0
    %984 = vmatpush1.msra.mxu0 %v541
    %985 = vmatprep.subr.mxu0 0.0
    %986 = vmatpush1.msra.mxu0 %v540
    %987 = vmatprep.subr.mxu0 0.0
    %988 = vmatpush2.msra.mxu0 %v571
    %989 = vmatprep.subr.mxu0 0.0
    %990 = vmatpush2.msra.mxu0 %v570
    %991 = vmatprep.subr.mxu0 0.0
    %992 = vmatpush2.msra.mxu0 %v569
    %993 = vmatprep.subr.mxu0 0.0
    %994 = vmatpush2.msra.mxu0 %v568
    %995 = vmatprep.subr.mxu0 0.0
    %996 = vmatpush2.msra.mxu0 %v567
    %997 = vmatprep.subr.mxu0 0.0
    %998 = vmatpush2.msra.mxu0 %v566
    %999 = vmatprep.subr.mxu0 0.0
    %1000 = vmatpush2.msra.mxu0 %v565
    %1001 = vmatprep.subr.mxu0 0.0
    %1002 = vmatpush2.msra.mxu0 %v564
    %1003 = vmatprep.subr.mxu0 0.0
    %1004 = vmatpush2.msra.mxu0 %v563
    %1005 = vmatprep.subr.mxu0 0.0
    %1006 = vmatpush2.msra.mxu0 %v562
    %1007 = vmatprep.subr.mxu0 0.0
    %1008 = vmatpush2.msra.mxu0 %v561
    %1009 = vmatprep.subr.mxu0 0.0
    %1010 = vmatpush2.msra.mxu0 %v560
    %1011 = vmatprep.subr.mxu0 0.0
    %1012 = vmatpush2.msra.mxu0 %v559
    %1013 = vmatprep.subr.mxu0 0.0
    %1014 = vmatpush2.msra.mxu0 %v558
    %1015 = vmatprep.subr.mxu0 0.0
    %1016 = vmatpush2.msra.mxu0 %v557
    %1017 = vmatprep.subr.mxu0 0.0
    %1018 = vmatpush2.msra.mxu0 %v556
    %1019 = vmatprep.mubr.f32.mxu0 %v405
    %1020 = vmatmul.mubr.f32.gmra.mxu0 %v404
    %v1021 = vpop.f32.mrf.mxu0
    %v1022 = vadd.f32 %v952, %v1021
    %v1023 = vpop.f32.mrf.mxu0
    %1024 = vdwg.mxu0
    %1025 = vmatprep.subr.mxu0 0.0
    %1026 = vmatpush1.msra.mxu0 %v587
    %1027 = vmatprep.subr.mxu0 0.0
    %1028 = vmatpush1.msra.mxu0 %v586
    %1029 = vmatprep.subr.mxu0 0.0
    %1030 = vmatpush1.msra.mxu0 %v585
    %1031 = vmatprep.subr.mxu0 0.0
    %1032 = vmatpush1.msra.mxu0 %v584
    %1033 = vmatprep.subr.mxu0 0.0
    %1034 = vmatpush1.msra.mxu0 %v583
    %1035 = vmatprep.subr.mxu0 0.0
    %1036 = vmatpush1.msra.mxu0 %v582
    %1037 = vmatprep.subr.mxu0 0.0
    %1038 = vmatpush1.msra.mxu0 %v581
    %1039 = vmatprep.subr.mxu0 0.0
    %1040 = vmatpush1.msra.mxu0 %v580
    %1041 = vmatprep.subr.mxu0 0.0
    %1042 = vmatpush1.msra.mxu0 %v579
    %1043 = vmatprep.subr.mxu0 0.0
    %1044 = vmatpush1.msra.mxu0 %v578
    %1045 = vmatprep.subr.mxu0 0.0
    %1046 = vmatpush1.msra.mxu0 %v577
    %1047 = vmatprep.subr.mxu0 0.0
    %1048 = vmatpush1.msra.mxu0 %v576
    %1049 = vmatprep.subr.mxu0 0.0
    %1050 = vmatpush1.msra.mxu0 %v575
    %1051 = vmatprep.subr.mxu0 0.0
    %1052 = vmatpush1.msra.mxu0 %v574
    %1053 = vmatprep.subr.mxu0 0.0
    %1054 = vmatpush1.msra.mxu0 %v573
    %1055 = vmatprep.subr.mxu0 0.0
    %1056 = vmatpush1.msra.mxu0 %v572
    %1057 = vmatprep.subr.mxu0 0.0
    %1058 = vmatpush2.msra.mxu0 %v603
    %1059 = vmatprep.subr.mxu0 0.0
    %1060 = vmatpush2.msra.mxu0 %v602
    %1061 = vmatprep.subr.mxu0 0.0
    %1062 = vmatpush2.msra.mxu0 %v601
    %1063 = vmatprep.subr.mxu0 0.0
    %1064 = vmatpush2.msra.mxu0 %v600
    %1065 = vmatprep.subr.mxu0 0.0
    %1066 = vmatpush2.msra.mxu0 %v599
    %1067 = vmatprep.subr.mxu0 0.0
    %1068 = vmatpush2.msra.mxu0 %v598
    %1069 = vmatprep.subr.mxu0 0.0
    %1070 = vmatpush2.msra.mxu0 %v597
    %1071 = vmatprep.subr.mxu0 0.0
    %1072 = vmatpush2.msra.mxu0 %v596
    %1073 = vmatprep.subr.mxu0 0.0
    %1074 = vmatpush2.msra.mxu0 %v595
    %1075 = vmatprep.subr.mxu0 0.0
    %1076 = vmatpush2.msra.mxu0 %v594
    %1077 = vmatprep.subr.mxu0 0.0
    %1078 = vmatpush2.msra.mxu0 %v593
    %1079 = vmatprep.subr.mxu0 0.0
    %1080 = vmatpush2.msra.mxu0 %v592
    %1081 = vmatprep.subr.mxu0 0.0
    %1082 = vmatpush2.msra.mxu0 %v591
    %1083 = vmatprep.subr.mxu0 0.0
    %1084 = vmatpush2.msra.mxu0 %v590
    %1085 = vmatprep.subr.mxu0 0.0
    %1086 = vmatpush2.msra.mxu0 %v589
    %1087 = vmatprep.subr.mxu0 0.0
    %1088 = vmatpush2.msra.mxu0 %v588
    %1089 = vmatprep.mubr.f32.mxu0 %v407
    %1090 = vmatmul.mubr.f32.gmra.mxu0 %v406
    %v1091 = vpop.f32.mrf.mxu0
    %v1092 = vadd.f32 %v1022, %v1091
    %v1093 = vpop.f32.mrf.mxu0
    %1094 = vdwg.mxu0
    %1095 = vmatprep.subr.mxu0 0.0
    %1096 = vmatpush1.msra.mxu0 %v619
    %1097 = vmatprep.subr.mxu0 0.0
    %1098 = vmatpush1.msra.mxu0 %v618
    %1099 = vmatprep.subr.mxu0 0.0
    %1100 = vmatpush1.msra.mxu0 %v617
    %1101 = vmatprep.subr.mxu0 0.0
    %1102 = vmatpush1.msra.mxu0 %v616
    %1103 = vmatprep.subr.mxu0 0.0
    %1104 = vmatpush1.msra.mxu0 %v615
    %1105 = vmatprep.subr.mxu0 0.0
    %1106 = vmatpush1.msra.mxu0 %v614
    %1107 = vmatprep.subr.mxu0 0.0
    %1108 = vmatpush1.msra.mxu0 %v613
    %1109 = vmatprep.subr.mxu0 0.0
    %1110 = vmatpush1.msra.mxu0 %v612
    %1111 = vmatprep.subr.mxu0 0.0
    %1112 = vmatpush1.msra.mxu0 %v611
    %1113 = vmatprep.subr.mxu0 0.0
    %1114 = vmatpush1.msra.mxu0 %v610
    %1115 = vmatprep.subr.mxu0 0.0
    %1116 = vmatpush1.msra.mxu0 %v609
    %1117 = vmatprep.subr.mxu0 0.0
    %1118 = vmatpush1.msra.mxu0 %v608
    %1119 = vmatprep.subr.mxu0 0.0
    %1120 = vmatpush1.msra.mxu0 %v607
    %1121 = vmatprep.subr.mxu0 0.0
    %1122 = vmatpush1.msra.mxu0 %v606
    %1123 = vmatprep.subr.mxu0 0.0
    %1124 = vmatpush1.msra.mxu0 %v605
    %1125 = vmatprep.subr.mxu0 0.0
    %1126 = vmatpush1.msra.mxu0 %v604
    %1127 = vmatprep.subr.mxu0 0.0
    %1128 = vmatpush2.msra.mxu0 %v635
    %1129 = vmatprep.subr.mxu0 0.0
    %1130 = vmatpush2.msra.mxu0 %v634
    %1131 = vmatprep.subr.mxu0 0.0
    %1132 = vmatpush2.msra.mxu0 %v633
    %1133 = vmatprep.subr.mxu0 0.0
    %1134 = vmatpush2.msra.mxu0 %v632
    %1135 = vmatprep.subr.mxu0 0.0
    %1136 = vmatpush2.msra.mxu0 %v631
    %1137 = vmatprep.subr.mxu0 0.0
    %1138 = vmatpush2.msra.mxu0 %v630
    %1139 = vmatprep.subr.mxu0 0.0
    %1140 = vmatpush2.msra.mxu0 %v629
    %1141 = vmatprep.subr.mxu0 0.0
    %1142 = vmatpush2.msra.mxu0 %v628
    %1143 = vmatprep.subr.mxu0 0.0
    %1144 = vmatpush2.msra.mxu0 %v627
    %1145 = vmatprep.subr.mxu0 0.0
    %1146 = vmatpush2.msra.mxu0 %v626
    %1147 = vmatprep.subr.mxu0 0.0
    %1148 = vmatpush2.msra.mxu0 %v625
    %1149 = vmatprep.subr.mxu0 0.0
    %1150 = vmatpush2.msra.mxu0 %v624
    %1151 = vmatprep.subr.mxu0 0.0
    %1152 = vmatpush2.msra.mxu0 %v623
    %1153 = vmatprep.subr.mxu0 0.0
    %1154 = vmatpush2.msra.mxu0 %v622
    %1155 = vmatprep.subr.mxu0 0.0
    %1156 = vmatpush2.msra.mxu0 %v621
    %1157 = vmatprep.subr.mxu0 0.0
    %1158 = vmatpush2.msra.mxu0 %v620
    %1159 = vmatprep.mubr.f32.mxu0 %v409
    %1160 = vmatmul.mubr.f32.gmra.mxu0 %v408
    %v1161 = vpop.f32.mrf.mxu0
    %v1162 = vadd.f32 %v1092, %v1161
    %v1163 = vpop.f32.mrf.mxu0
    %1164 = vdwg.mxu0
    %1165 = vmatprep.subr.mxu0 0.0
    %1166 = vmatpush1.msra.mxu0 %v651
    %1167 = vmatprep.subr.mxu0 0.0
    %1168 = vmatpush1.msra.mxu0 %v650
    %1169 = vmatprep.subr.mxu0 0.0
    %1170 = vmatpush1.msra.mxu0 %v649
    %1171 = vmatprep.subr.mxu0 0.0
    %1172 = vmatpush1.msra.mxu0 %v648
    %1173 = vmatprep.subr.mxu0 0.0
    %1174 = vmatpush1.msra.mxu0 %v647
    %1175 = vmatprep.subr.mxu0 0.0
    %1176 = vmatpush1.msra.mxu0 %v646
    %1177 = vmatprep.subr.mxu0 0.0
    %1178 = vmatpush1.msra.mxu0 %v645
    %1179 = vmatprep.subr.mxu0 0.0
    %1180 = vmatpush1.msra.mxu0 %v644
    %1181 = vmatprep.subr.mxu0 0.0
    %1182 = vmatpush1.msra.mxu0 %v643
    %1183 = vmatprep.subr.mxu0 0.0
    %1184 = vmatpush1.msra.mxu0 %v642
    %1185 = vmatprep.subr.mxu0 0.0
    %1186 = vmatpush1.msra.mxu0 %v641
    %1187 = vmatprep.subr.mxu0 0.0
    %1188 = vmatpush1.msra.mxu0 %v640
    %1189 = vmatprep.subr.mxu0 0.0
    %1190 = vmatpush1.msra.mxu0 %v639
    %1191 = vmatprep.subr.mxu0 0.0
    %1192 = vmatpush1.msra.mxu0 %v638
    %1193 = vmatprep.subr.mxu0 0.0
    %1194 = vmatpush1.msra.mxu0 %v637
    %1195 = vmatprep.subr.mxu0 0.0
    %1196 = vmatpush1.msra.mxu0 %v636
    %1197 = vmatprep.subr.mxu0 0.0
    %1198 = vmatpush2.msra.mxu0 %v667
    %1199 = vmatprep.subr.mxu0 0.0
    %1200 = vmatpush2.msra.mxu0 %v666
    %1201 = vmatprep.subr.mxu0 0.0
    %1202 = vmatpush2.msra.mxu0 %v665
    %1203 = vmatprep.subr.mxu0 0.0
    %1204 = vmatpush2.msra.mxu0 %v664
    %1205 = vmatprep.subr.mxu0 0.0
    %1206 = vmatpush2.msra.mxu0 %v663
    %1207 = vmatprep.subr.mxu0 0.0
    %1208 = vmatpush2.msra.mxu0 %v662
    %1209 = vmatprep.subr.mxu0 0.0
    %1210 = vmatpush2.msra.mxu0 %v661
    %1211 = vmatprep.subr.mxu0 0.0
    %1212 = vmatpush2.msra.mxu0 %v660
    %1213 = vmatprep.subr.mxu0 0.0
    %1214 = vmatpush2.msra.mxu0 %v659
    %1215 = vmatprep.subr.mxu0 0.0
    %1216 = vmatpush2.msra.mxu0 %v658
    %1217 = vmatprep.subr.mxu0 0.0
    %1218 = vmatpush2.msra.mxu0 %v657
    %1219 = vmatprep.subr.mxu0 0.0
    %1220 = vmatpush2.msra.mxu0 %v656
    %1221 = vmatprep.subr.mxu0 0.0
    %1222 = vmatpush2.msra.mxu0 %v655
    %1223 = vmatprep.subr.mxu0 0.0
    %1224 = vmatpush2.msra.mxu0 %v654
    %1225 = vmatprep.subr.mxu0 0.0
    %1226 = vmatpush2.msra.mxu0 %v653
    %1227 = vmatprep.subr.mxu0 0.0
    %1228 = vmatpush2.msra.mxu0 %v652
    %1229 = vmatprep.mubr.f32.mxu0 %v411
    %1230 = vmatmul.mubr.f32.gmra.mxu0 %v410
    %v1231 = vpop.f32.mrf.mxu0
    %v1232 = vadd.f32 %v1162, %v1231
    %v1233 = vpop.f32.mrf.mxu0
    %1234 = vdwg.mxu0
    %v1235 = vmax.f32 %v1232, 0.0
    %v1236 = vld [vmem:[%s7] sm:$0xff]
    %v1237 = vld [vmem:[%s7 + $0x8] sm:$0xff]
    %v1238 = vld [vmem:[%s7 + $0x10] sm:$0xff]
    %v1239 = vld [vmem:[%s7 + $0x18] sm:$0xff]
    %v1240 = vld [vmem:[%s7 + $0x20] sm:$0xff]
    %v1241 = vld [vmem:[%s7 + $0x28] sm:$0xff]
    %v1242 = vld [vmem:[%s7 + $0x30] sm:$0xff]
    %v1243 = vld [vmem:[%s7 + $0x38] sm:$0xff]
    %v1244 = vld [vmem:[%s7 + $0x40] sm:$0xff]
    %v1245 = vld [vmem:[%s7 + $0x48] sm:$0xff]
    %v1246 = vld [vmem:[%s7 + $0x50] sm:$0xff]
    %v1247 = vld [vmem:[%s7 + $0x58] sm:$0xff]
    %v1248 = vld [vmem:[%s7 + $0x60] sm:$0xff]
    %v1249 = vld [vmem:[%s7 + $0x68] sm:$0xff]
    %v1250 = vld [vmem:[%s7 + $0x70] sm:$0xff]
    %v1251 = vld [vmem:[%s7 + $0x78] sm:$0xff]
    %v1252 = vld [vmem:[%s8] sm:$0x1]
    %v1254 = vlaneseq
    %v1255 = vshrl.u32 %v1254, 7
    %v1256 = vsub.s32 0, %v1255
    %v1257 = vrot.slane %v1252, %v1256
    %1259 = vmatprep.subr.mxu0 0.0
    %1260 = vmatpush1.msra.mxu0 %v1251
    %1261 = vmatprep.subr.mxu0 0.0
    %1262 = vmatpush1.msra.mxu0 %v1250
    %1263 = vmatprep.subr.mxu0 0.0
    %1264 = vmatpush1.msra.mxu0 %v1249
    %1265 = vmatprep.subr.mxu0 0.0
    %1266 = vmatpush1.msra.mxu0 %v1248
    %1267 = vmatprep.subr.mxu0 0.0
    %1268 = vmatpush1.msra.mxu0 %v1247
    %1269 = vmatprep.subr.mxu0 0.0
    %1270 = vmatpush1.msra.mxu0 %v1246
    %1271 = vmatprep.subr.mxu0 0.0
    %1272 = vmatpush1.msra.mxu0 %v1245
    %1273 = vmatprep.subr.mxu0 0.0
    %1274 = vmatpush1.msra.mxu0 %v1244
    %1275 = vmatprep.subr.mxu0 0.0
    %1276 = vmatpush1.msra.mxu0 %v1243
    %1277 = vmatprep.subr.mxu0 0.0
    %1278 = vmatpush1.msra.mxu0 %v1242
    %1279 = vmatprep.subr.mxu0 0.0
    %1280 = vmatpush1.msra.mxu0 %v1241
    %1281 = vmatprep.subr.mxu0 0.0
    %1282 = vmatpush1.msra.mxu0 %v1240
    %1283 = vmatprep.subr.mxu0 0.0
    %1284 = vmatpush1.msra.mxu0 %v1239
    %1285 = vmatprep.subr.mxu0 0.0
    %1286 = vmatpush1.msra.mxu0 %v1238
    %1287 = vmatprep.subr.mxu0 0.0
    %1288 = vmatpush1.msra.mxu0 %v1237
    %1289 = vmatprep.subr.mxu0 0.0
    %1290 = vmatpush1.msra.mxu0 %v1236
    %1291 = vmatprep.subr.mxu0 0.0
    %1292 = vmatpush2.msra.mxu0 0.0
    %1293 = vmatprep.subr.mxu0 0.0
    %1294 = vmatpush2.msra.mxu0 0.0
    %1295 = vmatprep.subr.mxu0 0.0
    %1296 = vmatpush2.msra.mxu0 0.0
    %1297 = vmatprep.subr.mxu0 0.0
    %1298 = vmatpush2.msra.mxu0 0.0
    %1299 = vmatprep.subr.mxu0 0.0
    %1300 = vmatpush2.msra.mxu0 0.0
    %1301 = vmatprep.subr.mxu0 0.0
    %1302 = vmatpush2.msra.mxu0 0.0
    %1303 = vmatprep.subr.mxu0 0.0
    %1304 = vmatpush2.msra.mxu0 0.0
    %1305 = vmatprep.subr.mxu0 0.0
    %1306 = vmatpush2.msra.mxu0 0.0
    %1307 = vmatprep.subr.mxu0 0.0
    %1308 = vmatpush2.msra.mxu0 0.0
    %1309 = vmatprep.subr.mxu0 0.0
    %1310 = vmatpush2.msra.mxu0 0.0
    %1311 = vmatprep.subr.mxu0 0.0
    %1312 = vmatpush2.msra.mxu0 0.0
    %1313 = vmatprep.subr.mxu0 0.0
    %1314 = vmatpush2.msra.mxu0 0.0
    %1315 = vmatprep.subr.mxu0 0.0
    %1316 = vmatpush2.msra.mxu0 0.0
    %1317 = vmatprep.subr.mxu0 0.0
    %1318 = vmatpush2.msra.mxu0 0.0
    %1319 = vmatprep.subr.mxu0 0.0
    %1320 = vmatpush2.msra.mxu0 0.0
    %1321 = vmatprep.subr.mxu0 0.0
    %1322 = vmatpush2.msra.mxu0 0.0
    %1323 = vmatprep.mubr.f32.mxu0 0.0
    %1324 = vmatmul.mubr.f32.gmra.mxu0 %v1235
    %v1325 = vpop.f32.mrf.mxu0
    %v1326 = vadd.f32 %v1257, %v1325
    %v1327 = vpop.f32.mrf.mxu0
    %1328 = vdwg.mxu0
    %vm1329 = vcmask 48128
    %v1330 = vsel %vm1329, %v1326, -inf
    %1331 = vmax.xlane.f32.xlu0 %v1330
    %v1332 = vpop.xlane.xlu0 %1331
    %v1333 = vsub.f32 %v1326, %v1332
    %v1334 = vmul.f32 %v1333, 1.442695
    %v1335 = vpow.pop %v1334
    %v1336 = vsel %vm1329, %v1335, 0.0
    %1337 = vadd.xlane.f32.xlu0 %v1336
    %v1338 = vpop.xlane.xlu0 %1337
    %v1339 = vrcp.pop %v1338
    %v1340 = vmul.f32 %v1335, %v1339
    %1341 = vst.msk [vmem:[#allocation6] sm:$0xff] %vm1329, %v1340
    // Predicated region
    $region42: #{tpu_custom_call.1} parent=1 // pred_check
      _
    $region43: #{tpu_custom_call.1} parent=1 // pred_check_branch
      %1343 = sbr.rel (0) target = $region45
    $region44: #{tpu_custom_call.1} parent=1 // pred_region
      %s1345 = ssub.s32 128, 128
      %1346 = vsyncadd [#allocation5], %s1345
      %s1348 = sshll.u32 [#allocation6], 4
      %s1349 = int_to_ptr.vmem [resolvable:$true] %s1348
      %1351 = dma.vmem_to_hbm [thread:$0]  %s1349, 128, %s9, [#allocation5]
    $region45: #{tpu_custom_call.1} parent=1 // pred_fallthru
      _
    // Predicated region
    $region46: #{tpu_custom_call.1} parent=1 // pred_check
      _
    $region47: #{tpu_custom_call.1} parent=1 // pred_check_branch
      %1353 = sbr.rel (0) target = $region49
    $region48: #{tpu_custom_call.1} parent=1 // pred_region
      %1354 = dma.done [#allocation5], 128
    $region49: #{tpu_custom_call.1} parent=1 // pred_fallthru
      _
    %1355 = vsyncpa [#allocation4], 1
    %1356 = vsyncpa [#allocation5], 1

</llo_original>
